<compile_context>
chip_gen: v7x
topology: tpu7x:2x2x1
jax: 0.10.0
libtpu: 0.0.40
codegen_flags: <defaults>
</compile_context>

<pallas_src>
import functools

import jax
import jax.numpy as jnp
from jax.experimental import pallas as pl
from jax.experimental.pallas import tpu as pltpu


def _posneg_kernel(x_ref, w_ref, b_ref, o_ref, *,
                   KH, KW, stride, tile_oh, Wo, compute_dtype):
    """x_ref: (1, slab_rows, Wp, C) NHWC slab; w_ref: (K, OCp); b_ref: (1, OCp);
    o_ref: (1, tile_oh*Wo, OCp)."""
    x = x_ref[0]                                       # (slab_rows, Wp, C)

    # In-kernel im2col: one (tile_oh*Wo, C) slice per tap; pos taps then neg taps.
    pos_cols, neg_cols = [], []
    for kh in range(KH):
        for kw in range(KW):
            sl = x[kh:kh + stride * tile_oh:stride,
                   kw:kw + stride * Wo:stride, :]      # (tile_oh, Wo, C)
            sl = sl.reshape(tile_oh * Wo, -1)          # (M, C)
            pos_cols.append(jnp.maximum(sl, 0.0))      # torch.clamp(x, min=0)
            neg_cols.append(jnp.minimum(sl, 0.0))      # torch.clamp(x, max=0)
    xcat = jnp.concatenate(pos_cols + neg_cols, axis=-1)        # (M, 2K)

    w = w_ref[...]                                               # (K, OCp)
    wcat = jnp.concatenate([jnp.maximum(w, 0.0),                 # W+
                            jnp.minimum(w, 0.0)], axis=0)        # W-  -> (2K, OCp)

    if compute_dtype is not None:
        xcat = xcat.astype(compute_dtype)
        wcat = wcat.astype(compute_dtype)

    # Single fused MXU pass, f32 accumulation.
    acc = jnp.dot(xcat, wcat, preferred_element_type=jnp.float32)
    acc = acc + b_ref[...]                    # bias added once (b+ + b- == b)
    o_ref[0] = acc.astype(o_ref.dtype)


def posnegconv_forward(x, weight, bias, *, stride=1, padding=1,
                       ignorebias=False, tile_oh=None, compute_dtype=None):
    """Forward pass of posnegconv.  x: (B,C,H,W), weight: (OC,C,KH,KW)."""
    B, C, H, W = x.shape
    OC, _, KH, KW = weight.shape
    Ho = (H + 2 * padding - KH) // stride + 1
    Wo = (W + 2 * padding - KW) // stride + 1
    K = C * KH * KW
    OCp = pl.cdiv(OC, 128) * 128              # lane-dense output columns

    # Output-row tile: aim for ~512 matmul rows per grid step (mem-bound sweet
    # spot), capped at the full image height.
    if tile_oh is None:
        tile_oh = max(1, min(Ho, 512 // max(1, Wo)))
    n_t = pl.cdiv(Ho, tile_oh)

    # ---- wrapper glue: NHWC + spatial zero pad (no im2col in HBM) ----
    x_nhwc = jnp.transpose(x, (0, 2, 3, 1))                      # (B, H, W, C)
    x_pad = jnp.pad(x_nhwc,
                    ((0, 0), (padding, padding), (padding, padding), (0, 0)))
    Hp = H + 2 * padding
    Wp = W + 2 * padding

    slab_rows = (tile_oh - 1) * stride + KH
    need_rows = (n_t * tile_oh - 1) * stride + KH
    if need_rows > Hp:                         # bottom pad so the last tile exists
        x_pad = jnp.pad(x_pad, ((0, 0), (0, need_rows - Hp), (0, 0), (0, 0)))

    # Per-tile row slabs: only the (KH-1)-row halo is duplicated.
    slabs = jnp.stack(
        [x_pad[:, t * tile_oh * stride: t * tile_oh * stride + slab_rows]
         for t in range(n_t)], axis=1)          # (B, n_t, slab_rows, Wp, C)
    slabs = slabs.reshape(B * n_t, slab_rows, Wp, C)

    # weight (OC,C,KH,KW) -> (KH,KW,C,OC) -> (K, OC): row order (kh, kw, c)
    # matches the in-kernel tap order; pad OC to OCp.
    w2d = jnp.transpose(weight, (2, 3, 1, 0)).reshape(K, OC)
    w2d = jnp.pad(w2d, ((0, 0), (0, OCp - OC)))

    if ignorebias or bias is None:
        b2d = jnp.zeros((1, OCp), jnp.float32)
    else:
        b2d = jnp.pad(bias.astype(jnp.float32).reshape(1, OC),
                      ((0, 0), (0, OCp - OC)))

    Mrows = tile_oh * Wo
    kern = functools.partial(_posneg_kernel, KH=KH, KW=KW, stride=stride,
                             tile_oh=tile_oh, Wo=Wo, compute_dtype=compute_dtype)

    bytes_acc = (slabs.size * slabs.dtype.itemsize
                 + w2d.size * w2d.dtype.itemsize
                 + b2d.size * 4
                 + B * n_t * Mrows * OCp * jnp.dtype(x.dtype).itemsize)
    cost = pl.CostEstimate(flops=2 * B * n_t * Mrows * (2 * K) * OCp,
                           transcendentals=0,
                           bytes_accessed=int(bytes_acc))

    out3 = pl.pallas_call(
        kern,
        out_shape=jax.ShapeDtypeStruct((B * n_t, Mrows, OCp), x.dtype),
        grid_spec=pltpu.PrefetchScalarGridSpec(
            num_scalar_prefetch=0,
            grid=(B * n_t,),
            in_specs=[
                pl.BlockSpec((1, slab_rows, Wp, C), lambda i: (i, 0, 0, 0)),
                pl.BlockSpec((K, OCp), lambda i: (0, 0)),    # single weight
                pl.BlockSpec((1, OCp), lambda i: (0, 0)),    # single bias
            ],
            out_specs=pl.BlockSpec((1, Mrows, OCp), lambda i: (i, 0, 0)),
        ),
        compiler_params=pltpu.CompilerParams(
            dimension_semantics=("parallel",)),
        cost_estimate=cost,
    )(slabs, w2d, b2d)

    # (B*n_t, tile_oh*Wo, OCp) -> (B, n_t*tile_oh, Wo, OCp) -> crop -> NCHW
    out = out3.reshape(B, n_t * tile_oh, Wo, OCp)[:, :Ho, :, :OC]
    return jnp.transpose(out, (0, 3, 1, 2))


def _reference_posnegconv(x, weight, bias, *, stride=1, padding=1, ignorebias=False):
    """Pure-JAX reference matching the PyTorch module semantics."""
    dn = ("NCHW", "OIHW", "NCHW")
    wp = jnp.maximum(weight, 0.0)
    wn = jnp.minimum(weight, 0.0)
    vp = jax.lax.conv_general_dilated(
        jnp.maximum(x, 0.0), wp, (stride, stride),
        [(padding, padding), (padding, padding)], dimension_numbers=dn)
    vn = jax.lax.conv_general_dilated(
        jnp.minimum(x, 0.0), wn, (stride, stride),
        [(padding, padding), (padding, padding)], dimension_numbers=dn)
    if (not ignorebias) and (bias is not None):
        vp = vp + jnp.maximum(bias, 0.0).reshape(1, -1, 1, 1)
        vn = vn + jnp.minimum(bias, 0.0).reshape(1, -1, 1, 1)
    return vp + vn


if __name__ == "__main__":
    key = jax.random.PRNGKey(0)
    kx, kw, kb = jax.random.split(key, 3)

    # Small Conv2d: in_channels=4, out_channels=8, kernel=3x3, stride=1, padding=1
    B, C, H, W = 2, 4, 16, 16
    OC, KH, KW = 8, 3, 3

    x = jax.random.normal(kx, (B, C, H, W), dtype=jnp.float32)
    weight = jax.random.normal(kw, (OC, C, KH, KW), dtype=jnp.float32) * 0.1
    bias = jax.random.normal(kb, (OC,), dtype=jnp.float32) * 0.1

    fwd = jax.jit(functools.partial(posnegconv_forward,
                                    stride=1, padding=1, ignorebias=False))
    out = fwd(x, weight, bias)
    jax.block_until_ready(out)

    ref = _reference_posnegconv(x, weight, bias, stride=1, padding=1, ignorebias=False)
    assert out.shape == (B, OC, H, W), out.shape
    assert jnp.allclose(out, ref, atol=1e-4, rtol=1e-4), "mismatch vs reference"

    print("KERNEL_OK")
</pallas_src>

<mosaic_0001>
module attributes {stable_mosaic.version = 11 : i64} {
  func.func @_posneg_kernel(%arg0: i32, %arg1: memref<1x18x18x4xf32, #tpu.memory_space<vmem>>, %arg2: memref<36x128xf32, #tpu.memory_space<vmem>>, %arg3: memref<1x128xf32, #tpu.memory_space<vmem>>, %arg4: memref<1x256x128xf32, #tpu.memory_space<vmem>>) attributes {dimension_semantics = [#tpu.dimension_semantics<parallel>], iteration_bounds = array<i64: 2>, scalar_prefetch = 0 : i64, scratch_operands = 0 : i64, tpu.core_type = #tpu.core_type<tc>, window_params = [{transform_indices = @transform_0, window_bounds = array<i64: 1, 18, 18, 4>}, {pipeline_mode = #tpu.pipeline_mode<synchronous>, transform_indices = @transform_1, window_bounds = array<i64: 36, 128>}, {pipeline_mode = #tpu.pipeline_mode<synchronous>, transform_indices = @transform_2, window_bounds = array<i64: 1, 128>}, {transform_indices = @transform_3, window_bounds = array<i64: 1, 256, 128>}]} {
    %c0 = arith.constant 0 : index
    %c0_0 = arith.constant 0 : index
    %c0_1 = arith.constant 0 : index
    %c0_2 = arith.constant 0 : index
    %0 = vector.load %arg1[%c0, %c0_0, %c0_1, %c0_2] : memref<1x18x18x4xf32, #tpu.memory_space<vmem>>, vector<1x18x18x4xf32>
    %1 = vector.shape_cast %0 : vector<1x18x18x4xf32> to vector<18x18x4xf32>
    %2 = vector.extract_strided_slice %1 {offsets = [0, 0, 0], sizes = [16, 16, 4], strides = [1, 1, 1]} : vector<18x18x4xf32> to vector<16x16x4xf32>
    %3 = vector.shape_cast %2 : vector<16x16x4xf32> to vector<256x4xf32>
    %cst = arith.constant 0.000000e+00 : f32
    %4 = vector.broadcast %cst : f32 to vector<256x4xf32>
    %5 = arith.maximumf %3, %4 : vector<256x4xf32>
    %cst_3 = arith.constant 0.000000e+00 : f32
    %6 = vector.broadcast %cst_3 : f32 to vector<256x4xf32>
    %7 = arith.minimumf %3, %6 : vector<256x4xf32>
    %8 = vector.extract_strided_slice %1 {offsets = [0, 1, 0], sizes = [16, 16, 4], strides = [1, 1, 1]} : vector<18x18x4xf32> to vector<16x16x4xf32>
    %9 = vector.shape_cast %8 : vector<16x16x4xf32> to vector<256x4xf32>
    %cst_4 = arith.constant 0.000000e+00 : f32
    %10 = vector.broadcast %cst_4 : f32 to vector<256x4xf32>
    %11 = arith.maximumf %9, %10 : vector<256x4xf32>
    %cst_5 = arith.constant 0.000000e+00 : f32
    %12 = vector.broadcast %cst_5 : f32 to vector<256x4xf32>
    %13 = arith.minimumf %9, %12 : vector<256x4xf32>
    %14 = vector.extract_strided_slice %1 {offsets = [0, 2, 0], sizes = [16, 16, 4], strides = [1, 1, 1]} : vector<18x18x4xf32> to vector<16x16x4xf32>
    %15 = vector.shape_cast %14 : vector<16x16x4xf32> to vector<256x4xf32>
    %cst_6 = arith.constant 0.000000e+00 : f32
    %16 = vector.broadcast %cst_6 : f32 to vector<256x4xf32>
    %17 = arith.maximumf %15, %16 : vector<256x4xf32>
    %cst_7 = arith.constant 0.000000e+00 : f32
    %18 = vector.broadcast %cst_7 : f32 to vector<256x4xf32>
    %19 = arith.minimumf %15, %18 : vector<256x4xf32>
    %20 = vector.extract_strided_slice %1 {offsets = [1, 0, 0], sizes = [16, 16, 4], strides = [1, 1, 1]} : vector<18x18x4xf32> to vector<16x16x4xf32>
    %21 = vector.shape_cast %20 : vector<16x16x4xf32> to vector<256x4xf32>
    %cst_8 = arith.constant 0.000000e+00 : f32
    %22 = vector.broadcast %cst_8 : f32 to vector<256x4xf32>
    %23 = arith.maximumf %21, %22 : vector<256x4xf32>
    %cst_9 = arith.constant 0.000000e+00 : f32
    %24 = vector.broadcast %cst_9 : f32 to vector<256x4xf32>
    %25 = arith.minimumf %21, %24 : vector<256x4xf32>
    %26 = vector.extract_strided_slice %1 {offsets = [1, 1, 0], sizes = [16, 16, 4], strides = [1, 1, 1]} : vector<18x18x4xf32> to vector<16x16x4xf32>
    %27 = vector.shape_cast %26 : vector<16x16x4xf32> to vector<256x4xf32>
    %cst_10 = arith.constant 0.000000e+00 : f32
    %28 = vector.broadcast %cst_10 : f32 to vector<256x4xf32>
    %29 = arith.maximumf %27, %28 : vector<256x4xf32>
    %cst_11 = arith.constant 0.000000e+00 : f32
    %30 = vector.broadcast %cst_11 : f32 to vector<256x4xf32>
    %31 = arith.minimumf %27, %30 : vector<256x4xf32>
    %32 = vector.extract_strided_slice %1 {offsets = [1, 2, 0], sizes = [16, 16, 4], strides = [1, 1, 1]} : vector<18x18x4xf32> to vector<16x16x4xf32>
    %33 = vector.shape_cast %32 : vector<16x16x4xf32> to vector<256x4xf32>
    %cst_12 = arith.constant 0.000000e+00 : f32
    %34 = vector.broadcast %cst_12 : f32 to vector<256x4xf32>
    %35 = arith.maximumf %33, %34 : vector<256x4xf32>
    %cst_13 = arith.constant 0.000000e+00 : f32
    %36 = vector.broadcast %cst_13 : f32 to vector<256x4xf32>
    %37 = arith.minimumf %33, %36 : vector<256x4xf32>
    %38 = vector.extract_strided_slice %1 {offsets = [2, 0, 0], sizes = [16, 16, 4], strides = [1, 1, 1]} : vector<18x18x4xf32> to vector<16x16x4xf32>
    %39 = vector.shape_cast %38 : vector<16x16x4xf32> to vector<256x4xf32>
    %cst_14 = arith.constant 0.000000e+00 : f32
    %40 = vector.broadcast %cst_14 : f32 to vector<256x4xf32>
    %41 = arith.maximumf %39, %40 : vector<256x4xf32>
    %cst_15 = arith.constant 0.000000e+00 : f32
    %42 = vector.broadcast %cst_15 : f32 to vector<256x4xf32>
    %43 = arith.minimumf %39, %42 : vector<256x4xf32>
    %44 = vector.extract_strided_slice %1 {offsets = [2, 1, 0], sizes = [16, 16, 4], strides = [1, 1, 1]} : vector<18x18x4xf32> to vector<16x16x4xf32>
    %45 = vector.shape_cast %44 : vector<16x16x4xf32> to vector<256x4xf32>
    %cst_16 = arith.constant 0.000000e+00 : f32
    %46 = vector.broadcast %cst_16 : f32 to vector<256x4xf32>
    %47 = arith.maximumf %45, %46 : vector<256x4xf32>
    %cst_17 = arith.constant 0.000000e+00 : f32
    %48 = vector.broadcast %cst_17 : f32 to vector<256x4xf32>
    %49 = arith.minimumf %45, %48 : vector<256x4xf32>
    %50 = vector.extract_strided_slice %1 {offsets = [2, 2, 0], sizes = [16, 16, 4], strides = [1, 1, 1]} : vector<18x18x4xf32> to vector<16x16x4xf32>
    %51 = vector.shape_cast %50 : vector<16x16x4xf32> to vector<256x4xf32>
    %cst_18 = arith.constant 0.000000e+00 : f32
    %52 = vector.broadcast %cst_18 : f32 to vector<256x4xf32>
    %53 = arith.maximumf %51, %52 : vector<256x4xf32>
    %cst_19 = arith.constant 0.000000e+00 : f32
    %54 = vector.broadcast %cst_19 : f32 to vector<256x4xf32>
    %55 = arith.minimumf %51, %54 : vector<256x4xf32>
    %56 = tpu.concatenate %5, %11, %17, %23, %29, %35, %41, %47, %53, %7, %13, %19, %25, %31, %37, %43 in 1 : vector<256x4xf32>, vector<256x4xf32>, vector<256x4xf32>, vector<256x4xf32>, vector<256x4xf32>, vector<256x4xf32>, vector<256x4xf32>, vector<256x4xf32>, vector<256x4xf32>, vector<256x4xf32>, vector<256x4xf32>, vector<256x4xf32>, vector<256x4xf32>, vector<256x4xf32>, vector<256x4xf32>, vector<256x4xf32> -> vector<256x64xf32>
    %57 = tpu.concatenate %49, %55 in 1 : vector<256x4xf32>, vector<256x4xf32> -> vector<256x8xf32>
    %58 = tpu.concatenate %56, %57 in 1 : vector<256x64xf32>, vector<256x8xf32> -> vector<256x72xf32>
    %c0_20 = arith.constant 0 : index
    %c0_21 = arith.constant 0 : index
    %59 = vector.load %arg2[%c0_20, %c0_21] : memref<36x128xf32, #tpu.memory_space<vmem>>, vector<36x128xf32>
    %cst_22 = arith.constant 0.000000e+00 : f32
    %60 = vector.broadcast %cst_22 : f32 to vector<36x128xf32>
    %61 = arith.maximumf %59, %60 : vector<36x128xf32>
    %cst_23 = arith.constant 0.000000e+00 : f32
    %62 = vector.broadcast %cst_23 : f32 to vector<36x128xf32>
    %63 = arith.minimumf %59, %62 : vector<36x128xf32>
    %64 = tpu.concatenate %61, %63 in 0 : vector<36x128xf32>, vector<36x128xf32> -> vector<72x128xf32>
    %cst_24 = arith.constant dense<0.000000e+00> : vector<256x128xf32>
    %65 = tpu.matmul %58, %64, %cst_24 {dimension_numbers = #tpu.dot_dimension_numbers<[1], [0], [0], [1], [0, 0, 1, 1], [], []>} : vector<256x72xf32>, vector<72x128xf32>, vector<256x128xf32> -> vector<256x128xf32>
    %c0_25 = arith.constant 0 : index
    %c0_26 = arith.constant 0 : index
    %66 = vector.load %arg3[%c0_25, %c0_26] : memref<1x128xf32, #tpu.memory_space<vmem>>, vector<1x128xf32>
    %67 = vector.broadcast %66 : vector<1x128xf32> to vector<256x128xf32>
    %68 = arith.addf %65, %67 : vector<256x128xf32>
    %c0_27 = arith.constant 0 : index
    %c0_28 = arith.constant 0 : index
    %c0_29 = arith.constant 0 : index
    %69 = vector.load %arg4[%c0_27, %c0_28, %c0_29] : memref<1x256x128xf32, #tpu.memory_space<vmem>>, vector<1x256x128xf32>
    %70 = vector.shape_cast %69 : vector<1x256x128xf32> to vector<256x128xf32>
    %71 = vector.shape_cast %68 : vector<256x128xf32> to vector<1x256x128xf32>
    tpu.vector_store %arg4[%c0_27, %c0_28, %c0_29], %71 {strides = array<i32>} : memref<1x256x128xf32, #tpu.memory_space<vmem>>, vector<1x256x128xf32>,
    return
  }
  func.func @transform_0(%arg0: i32) -> (i32, i32, i32, i32) {
    %c0_i32 = arith.constant 0 : i32
    %c0_i32_0 = arith.constant 0 : i32
    %c0_i32_1 = arith.constant 0 : i32
    %c0_i32_2 = arith.constant 0 : i32
    return %arg0, %c0_i32, %c0_i32_0, %c0_i32_1 : i32, i32, i32, i32
  }
  func.func @transform_1(%arg0: i32) -> (i32, i32) {
    %c0_i32 = arith.constant 0 : i32
    %c0_i32_0 = arith.constant 0 : i32
    %c0_i32_1 = arith.constant 0 : i32
    return %c0_i32, %c0_i32_0 : i32, i32
  }
  func.func @transform_2(%arg0: i32) -> (i32, i32) {
    %c0_i32 = arith.constant 0 : i32
    %c0_i32_0 = arith.constant 0 : i32
    %c0_i32_1 = arith.constant 0 : i32
    return %c0_i32, %c0_i32_0 : i32, i32
  }
  func.func @transform_3(%arg0: i32) -> (i32, i32, i32) {
    %c0_i32 = arith.constant 0 : i32
    %c0_i32_0 = arith.constant 0 : i32
    %c0_i32_1 = arith.constant 0 : i32
    return %arg0, %c0_i32, %c0_i32_0 : i32, i32, i32
  }
}

</mosaic_0001>

<llo_original>
// kernel: posnegconv_forward.1
$region0: #{posnegconv_forward.1}
  #allocation0 [shape = 'u32[]', space=smem, size = 0x4, offset = 0x4, fixed_abs, tag = 'smem constant byte address 0x4 - core index']
  #allocation1 [shape = 'u32[144,128]{1,0:T(1,128)}', space=vmem, size = 0x12000, scoped, tag = 'internal scratch']
  %s0 = inlined_call_operand.vmem [shape: f32[2,18,18,4], index: 0, kind: input, shape index: {}]
  %s1 = inlined_call_operand.vmem [shape: f32[36,128], index: 1, kind: input, shape index: {}]
  %s2 = inlined_call_operand.vmem [shape: f32[1,128], index: 2, kind: input, shape index: {}]
  %s3 = inlined_call_operand.vmem [shape: f32[2,256,128], index: 3, kind: output, shape index: {}]
  %s4 = sld [smem:[#allocation0]]
  $region45: #{posnegconv_forward.1} parent=0
    _
  %s6 = ssub.s32 1, %s4
  %s7 = scalar_select 0, %s6, %s4
  loop: start=0, step=1, limit=4
  $region2: #{posnegconv_forward.1} parent=0 // loop_pre_header
    _
  $region3: #{posnegconv_forward.1} parent=0 // loop_header
    %s9 = sphi 0, %s13
    %p10 = scmp.ge.s32.totalorder %s9, 4
    %s19 = sphi 0, %s21
    %s22 = sphi 0, %s19
    %s23 = sphi 0, %s22
    %s39 = sphi 0, %s23
    %s43 = sphi 0, %s43
    %s45 = sphi 0, %s43
    %s46 = sphi 0, %s45
    %s60 = sphi 0, %s46
    %s64 = sphi 0, %s64
    %s66 = sphi 0, %s64
    %s67 = sphi 0, %s66
    %s81 = sphi 0, %s67
    %s87 = sphi 0, %s89
    %s90 = sphi 0, %s87
    %s91 = sphi 0, %s90
    %s107 = sphi 0, %s91
  $region4: #{posnegconv_forward.1} parent=0 // loop_header_branch
    %12 = sbr.rel (%p10) target = $region8
  $region5: #{posnegconv_forward.1} parent=0 // loop_body
    %s14 = ssub.s32 %s9, 1
    %s15 = ssub.s32 %s9, 2
    %s16 = sadd.s32 %s9, 1
    %s17 = ssub.s32 %s9, %s16
    %p18 = scmp.eq.s32.totalorder %s17, 0
    %s20 = sadd.s32 %s19, 1
    %s21 = scalar_select %p18, %s19, %s20
    %p24 = pneg %p18
    %p25 = scmp.eq.s32.totalorder %s9, 1
    %p26 = por %p24, %p25
    %p27 = scmp.ne.s32.totalorder %s19, %s22
    %p28 = scmp.eq.s32.totalorder %s9, 0
    %p29 = por %p27, %p28
    %p30 = scmp.ne.s32.totalorder %s19, %s22
    %p31 = scmp.eq.s32.totalorder %s14, 1
    %p32 = por %p30, %p31
    %p33 = scmp.ne.s32.totalorder %s22, %s23
    %p34 = scmp.eq.s32.totalorder %s14, 0
    %p35 = por %p33, %p34
    %p36 = scmp.ne.s32.totalorder %s22, %s23
    %p37 = scmp.eq.s32.totalorder %s15, 1
    %p38 = por %p36, %p37
    %p40 = scmp.ne.s32.totalorder %s23, %s39
    %p41 = scmp.eq.s32.totalorder %s15, 0
    %p42 = por %p40, %p41
    %s44 = sadd.s32 %s43, 1
    %p47 = scmp.eq.s32.totalorder %s9, 1
    %p48 = scmp.ne.s32.totalorder %s43, %s45
    %p49 = scmp.eq.s32.totalorder %s9, 0
    %p50 = por %p48, %p49
    %p51 = scmp.ne.s32.totalorder %s43, %s45
    %p52 = scmp.eq.s32.totalorder %s14, 1
    %p53 = por %p51, %p52
    %p54 = scmp.ne.s32.totalorder %s45, %s46
    %p55 = scmp.eq.s32.totalorder %s14, 0
    %p56 = por %p54, %p55
    %p57 = scmp.ne.s32.totalorder %s45, %s46
    %p58 = scmp.eq.s32.totalorder %s15, 1
    %p59 = por %p57, %p58
    %p61 = scmp.ne.s32.totalorder %s46, %s60
    %p62 = scmp.eq.s32.totalorder %s15, 0
    %p63 = por %p61, %p62
    %s65 = sadd.s32 %s64, 1
    %p68 = scmp.eq.s32.totalorder %s9, 1
    %p69 = scmp.ne.s32.totalorder %s64, %s66
    %p70 = scmp.eq.s32.totalorder %s9, 0
    %p71 = por %p69, %p70
    %p72 = scmp.ne.s32.totalorder %s64, %s66
    %p73 = scmp.eq.s32.totalorder %s14, 1
    %p74 = por %p72, %p73
    %p75 = scmp.ne.s32.totalorder %s66, %s67
    %p76 = scmp.eq.s32.totalorder %s14, 0
    %p77 = por %p75, %p76
    %p78 = scmp.ne.s32.totalorder %s66, %s67
    %p79 = scmp.eq.s32.totalorder %s15, 1
    %p80 = por %p78, %p79
    %p82 = scmp.ne.s32.totalorder %s67, %s81
    %p83 = scmp.eq.s32.totalorder %s15, 0
    %p84 = por %p82, %p83
    %s85 = ssub.s32 %s9, %s16
    %p86 = scmp.eq.s32.totalorder %s85, 0
    %s88 = sadd.s32 %s87, 1
    %s89 = scalar_select %p86, %s87, %s88
    %p92 = pneg %p86
    %p93 = scmp.eq.s32.totalorder %s9, 1
    %p94 = por %p92, %p93
    %p95 = scmp.ne.s32.totalorder %s87, %s90
    %p96 = scmp.eq.s32.totalorder %s9, 0
    %p97 = por %p95, %p96
    %p98 = scmp.ne.s32.totalorder %s87, %s90
    %p99 = scmp.eq.s32.totalorder %s14, 1
    %p100 = por %p98, %p99
    %p101 = scmp.ne.s32.totalorder %s90, %s91
    %p102 = scmp.eq.s32.totalorder %s14, 0
    %p103 = por %p101, %p102
    %p104 = scmp.ne.s32.totalorder %s90, %s91
    %p105 = scmp.eq.s32.totalorder %s15, 1
    %p106 = por %p104, %p105
    %p108 = scmp.ne.s32.totalorder %s91, %s107
    %p109 = scmp.eq.s32.totalorder %s15, 0
    %p110 = por %p108, %p109
    %p111 = scmp.le.s32.totalorder 1, %s9
    %p112 = scmp.lt.s32.totalorder %s9, 3
    %p113 = pnand %p111, %p112
    %p114 = pneg %p113
    // Predicated region
    $region9: #{posnegconv_forward.1} parent=5 // pred_check
      _
    $region10: #{posnegconv_forward.1} parent=5 // pred_check_branch
      %116 = sbr.rel (%p113) target = $region12
    $region11: #{posnegconv_forward.1} parent=5 // pred_region
      %s117 = ssub.s32 %s9, 1
      // Predicated region
      $region13: #{posnegconv_forward.1} parent=11 // pred_check
        %p118 = pneg %p56
      $region14: #{posnegconv_forward.1} parent=11 // pred_check_branch
        %120 = sbr.rel (%p118) target = $region16
      $region15: #{posnegconv_forward.1} parent=11 // pred_region
        _
      $region16: #{posnegconv_forward.1} parent=11 // pred_fallthru
        _
      // Predicated region
      $region17: #{posnegconv_forward.1} parent=11 // pred_check
        %p121 = pneg %p77
      $region18: #{posnegconv_forward.1} parent=11 // pred_check_branch
        %123 = sbr.rel (%p121) target = $region20
      $region19: #{posnegconv_forward.1} parent=11 // pred_region
        _
      $region20: #{posnegconv_forward.1} parent=11 // pred_fallthru
        _
    $region12: #{posnegconv_forward.1} parent=5 // pred_fallthru
      _
    %p124 = scmp.lt.s32.totalorder %s9, 2
    // Predicated region
    $region21: #{posnegconv_forward.1} parent=5 // pred_check
      %p125 = pneg %p124
    $region22: #{posnegconv_forward.1} parent=5 // pred_check_branch
      %127 = sbr.rel (%p125) target = $region24
    $region23: #{posnegconv_forward.1} parent=5 // pred_region
      // Predicated region
      $region25: #{posnegconv_forward.1} parent=23 // pred_check
        %p128 = pneg %p29
      $region26: #{posnegconv_forward.1} parent=23 // pred_check_branch
        %130 = sbr.rel (%p128) target = $region28
      $region27: #{posnegconv_forward.1} parent=23 // pred_region
        %p131 = scmp.lt.s32.totalorder %s9, 1
        %s132 = scalar_select %p131, %s9, 1
        %s133 = smul.addr %s132, 54
        %s134 = smul.addr %s133, 8
        %s135 = scalar_lea.vmem %s0, %s134
      $region28: #{posnegconv_forward.1} parent=23 // pred_fallthru
        _
    $region24: #{posnegconv_forward.1} parent=5 // pred_fallthru
      _
    %p136 = scmp.le.s32.totalorder 1, %s9
    %p137 = scmp.lt.s32.totalorder %s9, 3
    %p138 = pnand %p136, %p137
    %p139 = pneg %p138
    // Predicated region
    $region29: #{posnegconv_forward.1} parent=5 // pred_check
      _
    $region30: #{posnegconv_forward.1} parent=5 // pred_check_branch
      %141 = sbr.rel (%p138) target = $region32
    $region31: #{posnegconv_forward.1} parent=5 // pred_region
      %s142 = ssub.s32 %s9, 1
      %p143 = scmp.lt.s32.totalorder %s14, 1
      %s144 = scalar_select %p143, %s14, 1
      %s145 = smul.addr %s144, 54
      %s146 = smul.addr %s145, 8
      %s147 = scalar_lea.vmem %s0, %s146
      %p148 = pneg %p35
      %p149 = pneg %p32
      %p150 = pneg %p56
      %p151 = pneg %p53
      %p152 = pneg %p77
      %p153 = pneg %p74
      %p154 = pneg %p103
      %p155 = pneg %p100
      %p156 = scmp.lt.s32.totalorder %s14, 1
      %s157 = scalar_select %p156, %s14, 1
      %s158 = smul.addr %s157, 32
      %s159 = smul.addr %s158, 8
      %s160 = scalar_lea.vmem %s3, %s159
      %p161 = scmp.lt.s32.totalorder %s14, 1
      %s162 = scalar_select %p161, %s14, 1
      %s163 = smul.addr %s162, 54
      %s164 = smul.addr %s163, 8
      %s165 = scalar_lea.vmem %s0, %s164
      %p166 = scmp.lt.s32.totalorder %s14, 1
      %s167 = scalar_select %p166, %s14, 1
      %s168 = smul.addr %s167, 32
      %s169 = smul.addr %s168, 8
      %s170 = scalar_lea.vmem %s3, %s169
      %v171 = vld [vmem:[%s165] sm:$0xff]
      %v172 = vld [vmem:[%s165 + $0x8] sm:$0xff]
      %v173 = vld [vmem:[%s165 + $0x10] sm:$0x3]
      %v174 = vld [vmem:[%s165 + $0x18] sm:$0xff]
      %v175 = vld [vmem:[%s165 + $0x20] sm:$0xff]
      %v176 = vld [vmem:[%s165 + $0x28] sm:$0x3]
      %v177 = vld [vmem:[%s165 + $0x30] sm:$0xff]
      %v178 = vld [vmem:[%s165 + $0x38] sm:$0xff]
      %v179 = vld [vmem:[%s165 + $0x40] sm:$0x3]
      %v180 = vld [vmem:[%s165 + $0x48] sm:$0xff]
      %v181 = vld [vmem:[%s165 + $0x50] sm:$0xff]
      %v182 = vld [vmem:[%s165 + $0x58] sm:$0x3]
      %v183 = vld [vmem:[%s165 + $0x60] sm:$0xff]
      %v184 = vld [vmem:[%s165 + $0x68] sm:$0xff]
      %v185 = vld [vmem:[%s165 + $0x70] sm:$0x3]
      %v186 = vld [vmem:[%s165 + $0x78] sm:$0xff]
      %v187 = vld [vmem:[%s165 + $0x80] sm:$0xff]
      %v188 = vld [vmem:[%s165 + $0x88] sm:$0x3]
      %v189 = vld [vmem:[%s165 + $0x90] sm:$0xff]
      %v190 = vld [vmem:[%s165 + $0x98] sm:$0xff]
      %v191 = vld [vmem:[%s165 + $0xa0] sm:$0x3]
      %v192 = vld [vmem:[%s165 + $0xa8] sm:$0xff]
      %v193 = vld [vmem:[%s165 + $0xb0] sm:$0xff]
      %v194 = vld [vmem:[%s165 + $0xb8] sm:$0x3]
      %v195 = vld [vmem:[%s165 + $0xc0] sm:$0xff]
      %v196 = vld [vmem:[%s165 + $0xc8] sm:$0xff]
      %v197 = vld [vmem:[%s165 + $0xd0] sm:$0x3]
      %v198 = vld [vmem:[%s165 + $0xd8] sm:$0xff]
      %v199 = vld [vmem:[%s165 + $0xe0] sm:$0xff]
      %v200 = vld [vmem:[%s165 + $0xe8] sm:$0x3]
      %v201 = vld [vmem:[%s165 + $0xf0] sm:$0xff]
      %v202 = vld [vmem:[%s165 + $0xf8] sm:$0xff]
      %v203 = vld [vmem:[%s165 + $0x100] sm:$0x3]
      %v204 = vld [vmem:[%s165 + $0x108] sm:$0xff]
      %v205 = vld [vmem:[%s165 + $0x110] sm:$0xff]
      %v206 = vld [vmem:[%s165 + $0x118] sm:$0x3]
      %v207 = vld [vmem:[%s165 + $0x120] sm:$0xff]
      %v208 = vld [vmem:[%s165 + $0x128] sm:$0xff]
      %v209 = vld [vmem:[%s165 + $0x130] sm:$0x3]
      %v210 = vld [vmem:[%s165 + $0x138] sm:$0xff]
      %v211 = vld [vmem:[%s165 + $0x140] sm:$0xff]
      %v212 = vld [vmem:[%s165 + $0x148] sm:$0x3]
      %v213 = vld [vmem:[%s165 + $0x150] sm:$0xff]
      %v214 = vld [vmem:[%s165 + $0x158] sm:$0xff]
      %v215 = vld [vmem:[%s165 + $0x160] sm:$0x3]
      %v216 = vld [vmem:[%s165 + $0x168] sm:$0xff]
      %v217 = vld [vmem:[%s165 + $0x170] sm:$0xff]
      %v218 = vld [vmem:[%s165 + $0x178] sm:$0x3]
      %v219 = vld [vmem:[%s165 + $0x180] sm:$0xff]
      %v220 = vld [vmem:[%s165 + $0x188] sm:$0xff]
      %v221 = vld [vmem:[%s165 + $0x190] sm:$0x3]
      %v222 = vld [vmem:[%s165 + $0x198] sm:$0xff]
      %v223 = vld [vmem:[%s165 + $0x1a0] sm:$0xff]
      %v224 = vld [vmem:[%s165 + $0x1a8] sm:$0x3]
      %v225 = vmax.f32 %v171, 0.0
      %v226 = vmax.f32 %v172, 0.0
      %v227 = vmax.f32 %v174, 0.0
      %v228 = vmax.f32 %v175, 0.0
      %v229 = vmax.f32 %v177, 0.0
      %v230 = vmax.f32 %v178, 0.0
      %v231 = vmax.f32 %v180, 0.0
      %v232 = vmax.f32 %v181, 0.0
      %v233 = vmax.f32 %v183, 0.0
      %v234 = vmax.f32 %v184, 0.0
      %v235 = vmax.f32 %v186, 0.0
      %v236 = vmax.f32 %v187, 0.0
      %v237 = vmax.f32 %v189, 0.0
      %v238 = vmax.f32 %v190, 0.0
      %v239 = vmax.f32 %v192, 0.0
      %v240 = vmax.f32 %v193, 0.0
      %v241 = vmax.f32 %v195, 0.0
      %v242 = vmax.f32 %v196, 0.0
      %v243 = vmax.f32 %v198, 0.0
      %v244 = vmax.f32 %v199, 0.0
      %v245 = vmax.f32 %v201, 0.0
      %v246 = vmax.f32 %v202, 0.0
      %v247 = vmax.f32 %v204, 0.0
      %v248 = vmax.f32 %v205, 0.0
      %v249 = vmax.f32 %v207, 0.0
      %v250 = vmax.f32 %v208, 0.0
      %v251 = vmax.f32 %v210, 0.0
      %v252 = vmax.f32 %v211, 0.0
      %v253 = vmax.f32 %v213, 0.0
      %v254 = vmax.f32 %v214, 0.0
      %v255 = vmax.f32 %v216, 0.0
      %v256 = vmax.f32 %v217, 0.0
      %v257 = vmin.f32 %v171, 0.0
      %v258 = vmin.f32 %v172, 0.0
      %v259 = vmin.f32 %v174, 0.0
      %v260 = vmin.f32 %v175, 0.0
      %v261 = vmin.f32 %v177, 0.0
      %v262 = vmin.f32 %v178, 0.0
      %v263 = vmin.f32 %v180, 0.0
      %v264 = vmin.f32 %v181, 0.0
      %v265 = vmin.f32 %v183, 0.0
      %v266 = vmin.f32 %v184, 0.0
      %v267 = vmin.f32 %v186, 0.0
      %v268 = vmin.f32 %v187, 0.0
      %v269 = vmin.f32 %v189, 0.0
      %v270 = vmin.f32 %v190, 0.0
      %v271 = vmin.f32 %v192, 0.0
      %v272 = vmin.f32 %v193, 0.0
      %v273 = vmin.f32 %v195, 0.0
      %v274 = vmin.f32 %v196, 0.0
      %v275 = vmin.f32 %v198, 0.0
      %v276 = vmin.f32 %v199, 0.0
      %v277 = vmin.f32 %v201, 0.0
      %v278 = vmin.f32 %v202, 0.0
      %v279 = vmin.f32 %v204, 0.0
      %v280 = vmin.f32 %v205, 0.0
      %v281 = vmin.f32 %v207, 0.0
      %v282 = vmin.f32 %v208, 0.0
      %v283 = vmin.f32 %v210, 0.0
      %v284 = vmin.f32 %v211, 0.0
      %v285 = vmin.f32 %v213, 0.0
      %v286 = vmin.f32 %v214, 0.0
      %v287 = vmin.f32 %v216, 0.0
      %v288 = vmin.f32 %v217, 0.0
      %vm337 = vcmask 1046528
      %v338 = vrot.slane %v171, 1
      %v339 = vrot.slane %v172, 1
      %v340 = vsel %vm337, %v338, %v339
      %v341 = vrot.slane %v173, 1
      %v342 = vsel %vm337, %v339, %v341
      %v343 = vrot.slane %v174, 1
      %v344 = vrot.slane %v175, 1
      %v345 = vsel %vm337, %v343, %v344
      %v346 = vrot.slane %v176, 1
      %v347 = vsel %vm337, %v344, %v346
      %v348 = vrot.slane %v177, 1
      %v349 = vrot.slane %v178, 1
      %v350 = vsel %vm337, %v348, %v349
      %v351 = vrot.slane %v179, 1
      %v352 = vsel %vm337, %v349, %v351
      %v353 = vrot.slane %v180, 1
      %v354 = vrot.slane %v181, 1
      %v355 = vsel %vm337, %v353, %v354
      %v356 = vrot.slane %v182, 1
      %v357 = vsel %vm337, %v354, %v356
      %v358 = vrot.slane %v183, 1
      %v359 = vrot.slane %v184, 1
      %v360 = vsel %vm337, %v358, %v359
      %v361 = vrot.slane %v185, 1
      %v362 = vsel %vm337, %v359, %v361
      %v363 = vrot.slane %v186, 1
      %v364 = vrot.slane %v187, 1
      %v365 = vsel %vm337, %v363, %v364
      %v366 = vrot.slane %v188, 1
      %v367 = vsel %vm337, %v364, %v366
      %v368 = vrot.slane %v189, 1
      %v369 = vrot.slane %v190, 1
      %v370 = vsel %vm337, %v368, %v369
      %v371 = vrot.slane %v191, 1
      %v372 = vsel %vm337, %v369, %v371
      %v373 = vrot.slane %v192, 1
      %v374 = vrot.slane %v193, 1
      %v375 = vsel %vm337, %v373, %v374
      %v376 = vrot.slane %v194, 1
      %v377 = vsel %vm337, %v374, %v376
      %v378 = vrot.slane %v195, 1
      %v379 = vrot.slane %v196, 1
      %v380 = vsel %vm337, %v378, %v379
      %v381 = vrot.slane %v197, 1
      %v382 = vsel %vm337, %v379, %v381
      %v383 = vrot.slane %v198, 1
      %v384 = vrot.slane %v199, 1
      %v385 = vsel %vm337, %v383, %v384
      %v386 = vrot.slane %v200, 1
      %v387 = vsel %vm337, %v384, %v386
      %v388 = vrot.slane %v201, 1
      %v389 = vrot.slane %v202, 1
      %v390 = vsel %vm337, %v388, %v389
      %v391 = vrot.slane %v203, 1
      %v392 = vsel %vm337, %v389, %v391
      %v393 = vrot.slane %v204, 1
      %v394 = vrot.slane %v205, 1
      %v395 = vsel %vm337, %v393, %v394
      %v396 = vrot.slane %v206, 1
      %v397 = vsel %vm337, %v394, %v396
      %v398 = vrot.slane %v207, 1
      %v399 = vrot.slane %v208, 1
      %v400 = vsel %vm337, %v398, %v399
      %v401 = vrot.slane %v209, 1
      %v402 = vsel %vm337, %v399, %v401
      %v403 = vrot.slane %v210, 1
      %v404 = vrot.slane %v211, 1
      %v405 = vsel %vm337, %v403, %v404
      %v406 = vrot.slane %v212, 1
      %v407 = vsel %vm337, %v404, %v406
      %v408 = vrot.slane %v213, 1
      %v409 = vrot.slane %v214, 1
      %v410 = vsel %vm337, %v408, %v409
      %v411 = vrot.slane %v215, 1
      %v412 = vsel %vm337, %v409, %v411
      %v413 = vrot.slane %v216, 1
      %v414 = vrot.slane %v217, 1
      %v415 = vsel %vm337, %v413, %v414
      %v416 = vrot.slane %v218, 1
      %v417 = vsel %vm337, %v414, %v416
      %v450 = vmax.f32 %v340, 0.0
      %v451 = vmax.f32 %v342, 0.0
      %v452 = vmax.f32 %v345, 0.0
      %v453 = vmax.f32 %v347, 0.0
      %v454 = vmax.f32 %v350, 0.0
      %v455 = vmax.f32 %v352, 0.0
      %v456 = vmax.f32 %v355, 0.0
      %v457 = vmax.f32 %v357, 0.0
      %v458 = vmax.f32 %v360, 0.0
      %v459 = vmax.f32 %v362, 0.0
      %v460 = vmax.f32 %v365, 0.0
      %v461 = vmax.f32 %v367, 0.0
      %v462 = vmax.f32 %v370, 0.0
      %v463 = vmax.f32 %v372, 0.0
      %v464 = vmax.f32 %v375, 0.0
      %v465 = vmax.f32 %v377, 0.0
      %v466 = vmax.f32 %v380, 0.0
      %v467 = vmax.f32 %v382, 0.0
      %v468 = vmax.f32 %v385, 0.0
      %v469 = vmax.f32 %v387, 0.0
      %v470 = vmax.f32 %v390, 0.0
      %v471 = vmax.f32 %v392, 0.0
      %v472 = vmax.f32 %v395, 0.0
      %v473 = vmax.f32 %v397, 0.0
      %v474 = vmax.f32 %v400, 0.0
      %v475 = vmax.f32 %v402, 0.0
      %v476 = vmax.f32 %v405, 0.0
      %v477 = vmax.f32 %v407, 0.0
      %v478 = vmax.f32 %v410, 0.0
      %v479 = vmax.f32 %v412, 0.0
      %v480 = vmax.f32 %v415, 0.0
      %v481 = vmax.f32 %v417, 0.0
      %v482 = vmin.f32 %v340, 0.0
      %v483 = vmin.f32 %v342, 0.0
      %v484 = vmin.f32 %v345, 0.0
      %v485 = vmin.f32 %v347, 0.0
      %v486 = vmin.f32 %v350, 0.0
      %v487 = vmin.f32 %v352, 0.0
      %v488 = vmin.f32 %v355, 0.0
      %v489 = vmin.f32 %v357, 0.0
      %v490 = vmin.f32 %v360, 0.0
      %v491 = vmin.f32 %v362, 0.0
      %v492 = vmin.f32 %v365, 0.0
      %v493 = vmin.f32 %v367, 0.0
      %v494 = vmin.f32 %v370, 0.0
      %v495 = vmin.f32 %v372, 0.0
      %v496 = vmin.f32 %v375, 0.0
      %v497 = vmin.f32 %v377, 0.0
      %v498 = vmin.f32 %v380, 0.0
      %v499 = vmin.f32 %v382, 0.0
      %v500 = vmin.f32 %v385, 0.0
      %v501 = vmin.f32 %v387, 0.0
      %v502 = vmin.f32 %v390, 0.0
      %v503 = vmin.f32 %v392, 0.0
      %v504 = vmin.f32 %v395, 0.0
      %v505 = vmin.f32 %v397, 0.0
      %v506 = vmin.f32 %v400, 0.0
      %v507 = vmin.f32 %v402, 0.0
      %v508 = vmin.f32 %v405, 0.0
      %v509 = vmin.f32 %v407, 0.0
      %v510 = vmin.f32 %v410, 0.0
      %v511 = vmin.f32 %v412, 0.0
      %v512 = vmin.f32 %v415, 0.0
      %v513 = vmin.f32 %v417, 0.0
      %vm514 = vcmask 1045504
      %v515 = vrot.slane %v171, 2
      %v516 = vrot.slane %v172, 2
      %v517 = vsel %vm514, %v515, %v516
      %v518 = vrot.slane %v173, 2
      %v519 = vsel %vm514, %v516, %v518
      %v520 = vrot.slane %v174, 2
      %v521 = vrot.slane %v175, 2
      %v522 = vsel %vm514, %v520, %v521
      %v523 = vrot.slane %v176, 2
      %v524 = vsel %vm514, %v521, %v523
      %v525 = vrot.slane %v177, 2
      %v526 = vrot.slane %v178, 2
      %v527 = vsel %vm514, %v525, %v526
      %v528 = vrot.slane %v179, 2
      %v529 = vsel %vm514, %v526, %v528
      %v530 = vrot.slane %v180, 2
      %v531 = vrot.slane %v181, 2
      %v532 = vsel %vm514, %v530, %v531
      %v533 = vrot.slane %v182, 2
      %v534 = vsel %vm514, %v531, %v533
      %v535 = vrot.slane %v183, 2
      %v536 = vrot.slane %v184, 2
      %v537 = vsel %vm514, %v535, %v536
      %v538 = vrot.slane %v185, 2
      %v539 = vsel %vm514, %v536, %v538
      %v540 = vrot.slane %v186, 2
      %v541 = vrot.slane %v187, 2
      %v542 = vsel %vm514, %v540, %v541
      %v543 = vrot.slane %v188, 2
      %v544 = vsel %vm514, %v541, %v543
      %v545 = vrot.slane %v189, 2
      %v546 = vrot.slane %v190, 2
      %v547 = vsel %vm514, %v545, %v546
      %v548 = vrot.slane %v191, 2
      %v549 = vsel %vm514, %v546, %v548
      %v550 = vrot.slane %v192, 2
      %v551 = vrot.slane %v193, 2
      %v552 = vsel %vm514, %v550, %v551
      %v553 = vrot.slane %v194, 2
      %v554 = vsel %vm514, %v551, %v553
      %v555 = vrot.slane %v195, 2
      %v556 = vrot.slane %v196, 2
      %v557 = vsel %vm514, %v555, %v556
      %v558 = vrot.slane %v197, 2
      %v559 = vsel %vm514, %v556, %v558
      %v560 = vrot.slane %v198, 2
      %v561 = vrot.slane %v199, 2
      %v562 = vsel %vm514, %v560, %v561
      %v563 = vrot.slane %v200, 2
      %v564 = vsel %vm514, %v561, %v563
      %v565 = vrot.slane %v201, 2
      %v566 = vrot.slane %v202, 2
      %v567 = vsel %vm514, %v565, %v566
      %v568 = vrot.slane %v203, 2
      %v569 = vsel %vm514, %v566, %v568
      %v570 = vrot.slane %v204, 2
      %v571 = vrot.slane %v205, 2
      %v572 = vsel %vm514, %v570, %v571
      %v573 = vrot.slane %v206, 2
      %v574 = vsel %vm514, %v571, %v573
      %v575 = vrot.slane %v207, 2
      %v576 = vrot.slane %v208, 2
      %v577 = vsel %vm514, %v575, %v576
      %v578 = vrot.slane %v209, 2
      %v579 = vsel %vm514, %v576, %v578
      %v580 = vrot.slane %v210, 2
      %v581 = vrot.slane %v211, 2
      %v582 = vsel %vm514, %v580, %v581
      %v583 = vrot.slane %v212, 2
      %v584 = vsel %vm514, %v581, %v583
      %v585 = vrot.slane %v213, 2
      %v586 = vrot.slane %v214, 2
      %v587 = vsel %vm514, %v585, %v586
      %v588 = vrot.slane %v215, 2
      %v589 = vsel %vm514, %v586, %v588
      %v590 = vrot.slane %v216, 2
      %v591 = vrot.slane %v217, 2
      %v592 = vsel %vm514, %v590, %v591
      %v593 = vrot.slane %v218, 2
      %v594 = vsel %vm514, %v591, %v593
      %v627 = vmax.f32 %v517, 0.0
      %v628 = vmax.f32 %v519, 0.0
      %v629 = vmax.f32 %v522, 0.0
      %v630 = vmax.f32 %v524, 0.0
      %v631 = vmax.f32 %v527, 0.0
      %v632 = vmax.f32 %v529, 0.0
      %v633 = vmax.f32 %v532, 0.0
      %v634 = vmax.f32 %v534, 0.0
      %v635 = vmax.f32 %v537, 0.0
      %v636 = vmax.f32 %v539, 0.0
      %v637 = vmax.f32 %v542, 0.0
      %v638 = vmax.f32 %v544, 0.0
      %v639 = vmax.f32 %v547, 0.0
      %v640 = vmax.f32 %v549, 0.0
      %v641 = vmax.f32 %v552, 0.0
      %v642 = vmax.f32 %v554, 0.0
      %v643 = vmax.f32 %v557, 0.0
      %v644 = vmax.f32 %v559, 0.0
      %v645 = vmax.f32 %v562, 0.0
      %v646 = vmax.f32 %v564, 0.0
      %v647 = vmax.f32 %v567, 0.0
      %v648 = vmax.f32 %v569, 0.0
      %v649 = vmax.f32 %v572, 0.0
      %v650 = vmax.f32 %v574, 0.0
      %v651 = vmax.f32 %v577, 0.0
      %v652 = vmax.f32 %v579, 0.0
      %v653 = vmax.f32 %v582, 0.0
      %v654 = vmax.f32 %v584, 0.0
      %v655 = vmax.f32 %v587, 0.0
      %v656 = vmax.f32 %v589, 0.0
      %v657 = vmax.f32 %v592, 0.0
      %v658 = vmax.f32 %v594, 0.0
      %v659 = vmin.f32 %v517, 0.0
      %v660 = vmin.f32 %v519, 0.0
      %v661 = vmin.f32 %v522, 0.0
      %v662 = vmin.f32 %v524, 0.0
      %v663 = vmin.f32 %v527, 0.0
      %v664 = vmin.f32 %v529, 0.0
      %v665 = vmin.f32 %v532, 0.0
      %v666 = vmin.f32 %v534, 0.0
      %v667 = vmin.f32 %v537, 0.0
      %v668 = vmin.f32 %v539, 0.0
      %v669 = vmin.f32 %v542, 0.0
      %v670 = vmin.f32 %v544, 0.0
      %v671 = vmin.f32 %v547, 0.0
      %v672 = vmin.f32 %v549, 0.0
      %v673 = vmin.f32 %v552, 0.0
      %v674 = vmin.f32 %v554, 0.0
      %v675 = vmin.f32 %v557, 0.0
      %v676 = vmin.f32 %v559, 0.0
      %v677 = vmin.f32 %v562, 0.0
      %v678 = vmin.f32 %v564, 0.0
      %v679 = vmin.f32 %v567, 0.0
      %v680 = vmin.f32 %v569, 0.0
      %v681 = vmin.f32 %v572, 0.0
      %v682 = vmin.f32 %v574, 0.0
      %v683 = vmin.f32 %v577, 0.0
      %v684 = vmin.f32 %v579, 0.0
      %v685 = vmin.f32 %v582, 0.0
      %v686 = vmin.f32 %v584, 0.0
      %v687 = vmin.f32 %v587, 0.0
      %v688 = vmin.f32 %v589, 0.0
      %v689 = vmin.f32 %v592, 0.0
      %v690 = vmin.f32 %v594, 0.0
      %v691 = vmax.f32 %v219, 0.0
      %v692 = vmax.f32 %v220, 0.0
      %v693 = vmin.f32 %v219, 0.0
      %v694 = vmin.f32 %v220, 0.0
      %v698 = vrot.slane %v219, 1
      %v699 = vrot.slane %v220, 1
      %v700 = vsel %vm337, %v698, %v699
      %v701 = vrot.slane %v221, 1
      %v702 = vsel %vm337, %v699, %v701
      %v705 = vmax.f32 %v700, 0.0
      %v706 = vmax.f32 %v702, 0.0
      %v707 = vmin.f32 %v700, 0.0
      %v708 = vmin.f32 %v702, 0.0
      %v709 = vrot.slane %v219, 2
      %v710 = vrot.slane %v220, 2
      %v711 = vsel %vm514, %v709, %v710
      %v712 = vrot.slane %v221, 2
      %v713 = vsel %vm514, %v710, %v712
      %v716 = vmax.f32 %v711, 0.0
      %v717 = vmax.f32 %v713, 0.0
      %v718 = vmin.f32 %v711, 0.0
      %v719 = vmin.f32 %v713, 0.0
      %v720 = vmax.f32 %v222, 0.0
      %v721 = vmax.f32 %v223, 0.0
      %v722 = vmin.f32 %v222, 0.0
      %v723 = vmin.f32 %v223, 0.0
      %v727 = vrot.slane %v222, 1
      %v728 = vrot.slane %v223, 1
      %v729 = vsel %vm337, %v727, %v728
      %v730 = vrot.slane %v224, 1
      %v731 = vsel %vm337, %v728, %v730
      %v734 = vmax.f32 %v729, 0.0
      %v735 = vmax.f32 %v731, 0.0
      %v736 = vmin.f32 %v729, 0.0
      %v737 = vmin.f32 %v731, 0.0
      %v738 = vrot.slane %v222, 2
      %v739 = vrot.slane %v223, 2
      %v740 = vsel %vm514, %v738, %v739
      %v741 = vrot.slane %v224, 2
      %v742 = vsel %vm514, %v739, %v741
      %v745 = vmax.f32 %v740, 0.0
      %v746 = vmax.f32 %v742, 0.0
      %v747 = vmin.f32 %v740, 0.0
      %v748 = vmin.f32 %v742, 0.0
      %781 = vrot.lane.b32.xlu0 %v450, 4
      %v782 = vpop.permute.xlu0 %781
      %783 = vrot.lane.b32.xlu0 %v451, 4
      %v784 = vpop.permute.xlu0 %783
      %785 = vrot.lane.b32.xlu0 %v452, 4
      %v786 = vpop.permute.xlu0 %785
      %787 = vrot.lane.b32.xlu0 %v453, 4
      %v788 = vpop.permute.xlu0 %787
      %789 = vrot.lane.b32.xlu0 %v454, 4
      %v790 = vpop.permute.xlu0 %789
      %791 = vrot.lane.b32.xlu0 %v455, 4
      %v792 = vpop.permute.xlu0 %791
      %793 = vrot.lane.b32.xlu0 %v456, 4
      %v794 = vpop.permute.xlu0 %793
      %795 = vrot.lane.b32.xlu0 %v457, 4
      %v796 = vpop.permute.xlu0 %795
      %797 = vrot.lane.b32.xlu0 %v458, 4
      %v798 = vpop.permute.xlu0 %797
      %799 = vrot.lane.b32.xlu0 %v459, 4
      %v800 = vpop.permute.xlu0 %799
      %801 = vrot.lane.b32.xlu0 %v460, 4
      %v802 = vpop.permute.xlu0 %801
      %803 = vrot.lane.b32.xlu0 %v461, 4
      %v804 = vpop.permute.xlu0 %803
      %805 = vrot.lane.b32.xlu0 %v462, 4
      %v806 = vpop.permute.xlu0 %805
      %807 = vrot.lane.b32.xlu0 %v463, 4
      %v808 = vpop.permute.xlu0 %807
      %809 = vrot.lane.b32.xlu0 %v464, 4
      %v810 = vpop.permute.xlu0 %809
      %811 = vrot.lane.b32.xlu0 %v465, 4
      %v812 = vpop.permute.xlu0 %811
      %813 = vrot.lane.b32.xlu0 %v466, 4
      %v814 = vpop.permute.xlu0 %813
      %815 = vrot.lane.b32.xlu0 %v467, 4
      %v816 = vpop.permute.xlu0 %815
      %817 = vrot.lane.b32.xlu0 %v468, 4
      %v818 = vpop.permute.xlu0 %817
      %819 = vrot.lane.b32.xlu0 %v469, 4
      %v820 = vpop.permute.xlu0 %819
      %821 = vrot.lane.b32.xlu0 %v470, 4
      %v822 = vpop.permute.xlu0 %821
      %823 = vrot.lane.b32.xlu0 %v471, 4
      %v824 = vpop.permute.xlu0 %823
      %825 = vrot.lane.b32.xlu0 %v472, 4
      %v826 = vpop.permute.xlu0 %825
      %827 = vrot.lane.b32.xlu0 %v473, 4
      %v828 = vpop.permute.xlu0 %827
      %829 = vrot.lane.b32.xlu0 %v474, 4
      %v830 = vpop.permute.xlu0 %829
      %831 = vrot.lane.b32.xlu0 %v475, 4
      %v832 = vpop.permute.xlu0 %831
      %833 = vrot.lane.b32.xlu0 %v476, 4
      %v834 = vpop.permute.xlu0 %833
      %835 = vrot.lane.b32.xlu0 %v477, 4
      %v836 = vpop.permute.xlu0 %835
      %837 = vrot.lane.b32.xlu0 %v478, 4
      %v838 = vpop.permute.xlu0 %837
      %839 = vrot.lane.b32.xlu0 %v479, 4
      %v840 = vpop.permute.xlu0 %839
      %841 = vrot.lane.b32.xlu0 %v480, 4
      %v842 = vpop.permute.xlu0 %841
      %843 = vrot.lane.b32.xlu0 %v481, 4
      %v844 = vpop.permute.xlu0 %843
      %909 = vrot.lane.b32.xlu0 %v627, 8
      %v910 = vpop.permute.xlu0 %909
      %911 = vrot.lane.b32.xlu0 %v628, 8
      %v912 = vpop.permute.xlu0 %911
      %913 = vrot.lane.b32.xlu0 %v629, 8
      %v914 = vpop.permute.xlu0 %913
      %915 = vrot.lane.b32.xlu0 %v630, 8
      %v916 = vpop.permute.xlu0 %915
      %917 = vrot.lane.b32.xlu0 %v631, 8
      %v918 = vpop.permute.xlu0 %917
      %919 = vrot.lane.b32.xlu0 %v632, 8
      %v920 = vpop.permute.xlu0 %919
      %921 = vrot.lane.b32.xlu0 %v633, 8
      %v922 = vpop.permute.xlu0 %921
      %923 = vrot.lane.b32.xlu0 %v634, 8
      %v924 = vpop.permute.xlu0 %923
      %925 = vrot.lane.b32.xlu0 %v635, 8
      %v926 = vpop.permute.xlu0 %925
      %927 = vrot.lane.b32.xlu0 %v636, 8
      %v928 = vpop.permute.xlu0 %927
      %929 = vrot.lane.b32.xlu0 %v637, 8
      %v930 = vpop.permute.xlu0 %929
      %931 = vrot.lane.b32.xlu0 %v638, 8
      %v932 = vpop.permute.xlu0 %931
      %933 = vrot.lane.b32.xlu0 %v639, 8
      %v934 = vpop.permute.xlu0 %933
      %935 = vrot.lane.b32.xlu0 %v640, 8
      %v936 = vpop.permute.xlu0 %935
      %937 = vrot.lane.b32.xlu0 %v641, 8
      %v938 = vpop.permute.xlu0 %937
      %939 = vrot.lane.b32.xlu0 %v642, 8
      %v940 = vpop.permute.xlu0 %939
      %941 = vrot.lane.b32.xlu0 %v643, 8
      %v942 = vpop.permute.xlu0 %941
      %943 = vrot.lane.b32.xlu0 %v644, 8
      %v944 = vpop.permute.xlu0 %943
      %945 = vrot.lane.b32.xlu0 %v645, 8
      %v946 = vpop.permute.xlu0 %945
      %947 = vrot.lane.b32.xlu0 %v646, 8
      %v948 = vpop.permute.xlu0 %947
      %949 = vrot.lane.b32.xlu0 %v647, 8
      %v950 = vpop.permute.xlu0 %949
      %951 = vrot.lane.b32.xlu0 %v648, 8
      %v952 = vpop.permute.xlu0 %951
      %953 = vrot.lane.b32.xlu0 %v649, 8
      %v954 = vpop.permute.xlu0 %953
      %955 = vrot.lane.b32.xlu0 %v650, 8
      %v956 = vpop.permute.xlu0 %955
      %957 = vrot.lane.b32.xlu0 %v651, 8
      %v958 = vpop.permute.xlu0 %957
      %959 = vrot.lane.b32.xlu0 %v652, 8
      %v960 = vpop.permute.xlu0 %959
      %961 = vrot.lane.b32.xlu0 %v653, 8
      %v962 = vpop.permute.xlu0 %961
      %963 = vrot.lane.b32.xlu0 %v654, 8
      %v964 = vpop.permute.xlu0 %963
      %965 = vrot.lane.b32.xlu0 %v655, 8
      %v966 = vpop.permute.xlu0 %965
      %967 = vrot.lane.b32.xlu0 %v656, 8
      %v968 = vpop.permute.xlu0 %967
      %969 = vrot.lane.b32.xlu0 %v657, 8
      %v970 = vpop.permute.xlu0 %969
      %971 = vrot.lane.b32.xlu0 %v658, 8
      %v972 = vpop.permute.xlu0 %971
      %1037 = vrot.lane.b32.xlu0 %v227, 12
      %v1038 = vpop.permute.xlu0 %1037
      %1039 = vrot.lane.b32.xlu0 %v228, 12
      %v1040 = vpop.permute.xlu0 %1039
      %1041 = vrot.lane.b32.xlu0 %v229, 12
      %v1042 = vpop.permute.xlu0 %1041
      %1043 = vrot.lane.b32.xlu0 %v230, 12
      %v1044 = vpop.permute.xlu0 %1043
      %1045 = vrot.lane.b32.xlu0 %v231, 12
      %v1046 = vpop.permute.xlu0 %1045
      %1047 = vrot.lane.b32.xlu0 %v232, 12
      %v1048 = vpop.permute.xlu0 %1047
      %1049 = vrot.lane.b32.xlu0 %v233, 12
      %v1050 = vpop.permute.xlu0 %1049
      %1051 = vrot.lane.b32.xlu0 %v234, 12
      %v1052 = vpop.permute.xlu0 %1051
      %1053 = vrot.lane.b32.xlu0 %v235, 12
      %v1054 = vpop.permute.xlu0 %1053
      %1055 = vrot.lane.b32.xlu0 %v236, 12
      %v1056 = vpop.permute.xlu0 %1055
      %1057 = vrot.lane.b32.xlu0 %v237, 12
      %v1058 = vpop.permute.xlu0 %1057
      %1059 = vrot.lane.b32.xlu0 %v238, 12
      %v1060 = vpop.permute.xlu0 %1059
      %1061 = vrot.lane.b32.xlu0 %v239, 12
      %v1062 = vpop.permute.xlu0 %1061
      %1063 = vrot.lane.b32.xlu0 %v240, 12
      %v1064 = vpop.permute.xlu0 %1063
      %1065 = vrot.lane.b32.xlu0 %v241, 12
      %v1066 = vpop.permute.xlu0 %1065
      %1067 = vrot.lane.b32.xlu0 %v242, 12
      %v1068 = vpop.permute.xlu0 %1067
      %1069 = vrot.lane.b32.xlu0 %v243, 12
      %v1070 = vpop.permute.xlu0 %1069
      %1071 = vrot.lane.b32.xlu0 %v244, 12
      %v1072 = vpop.permute.xlu0 %1071
      %1073 = vrot.lane.b32.xlu0 %v245, 12
      %v1074 = vpop.permute.xlu0 %1073
      %1075 = vrot.lane.b32.xlu0 %v246, 12
      %v1076 = vpop.permute.xlu0 %1075
      %1077 = vrot.lane.b32.xlu0 %v247, 12
      %v1078 = vpop.permute.xlu0 %1077
      %1079 = vrot.lane.b32.xlu0 %v248, 12
      %v1080 = vpop.permute.xlu0 %1079
      %1081 = vrot.lane.b32.xlu0 %v249, 12
      %v1082 = vpop.permute.xlu0 %1081
      %1083 = vrot.lane.b32.xlu0 %v250, 12
      %v1084 = vpop.permute.xlu0 %1083
      %1085 = vrot.lane.b32.xlu0 %v251, 12
      %v1086 = vpop.permute.xlu0 %1085
      %1087 = vrot.lane.b32.xlu0 %v252, 12
      %v1088 = vpop.permute.xlu0 %1087
      %1089 = vrot.lane.b32.xlu0 %v253, 12
      %v1090 = vpop.permute.xlu0 %1089
      %1091 = vrot.lane.b32.xlu0 %v254, 12
      %v1092 = vpop.permute.xlu0 %1091
      %1093 = vrot.lane.b32.xlu0 %v255, 12
      %v1094 = vpop.permute.xlu0 %1093
      %1095 = vrot.lane.b32.xlu0 %v256, 12
      %v1096 = vpop.permute.xlu0 %1095
      %1097 = vrot.lane.b32.xlu0 %v691, 12
      %v1098 = vpop.permute.xlu0 %1097
      %1099 = vrot.lane.b32.xlu0 %v692, 12
      %v1100 = vpop.permute.xlu0 %1099
      %1135 = vrot.lane.b32.xlu0 %v452, 16
      %v1136 = vpop.permute.xlu0 %1135
      %1137 = vrot.lane.b32.xlu0 %v453, 16
      %v1138 = vpop.permute.xlu0 %1137
      %1139 = vrot.lane.b32.xlu0 %v454, 16
      %v1140 = vpop.permute.xlu0 %1139
      %1141 = vrot.lane.b32.xlu0 %v455, 16
      %v1142 = vpop.permute.xlu0 %1141
      %1143 = vrot.lane.b32.xlu0 %v456, 16
      %v1144 = vpop.permute.xlu0 %1143
      %1145 = vrot.lane.b32.xlu0 %v457, 16
      %v1146 = vpop.permute.xlu0 %1145
      %1147 = vrot.lane.b32.xlu0 %v458, 16
      %v1148 = vpop.permute.xlu0 %1147
      %1149 = vrot.lane.b32.xlu0 %v459, 16
      %v1150 = vpop.permute.xlu0 %1149
      %1151 = vrot.lane.b32.xlu0 %v460, 16
      %v1152 = vpop.permute.xlu0 %1151
      %1153 = vrot.lane.b32.xlu0 %v461, 16
      %v1154 = vpop.permute.xlu0 %1153
      %1155 = vrot.lane.b32.xlu0 %v462, 16
      %v1156 = vpop.permute.xlu0 %1155
      %1157 = vrot.lane.b32.xlu0 %v463, 16
      %v1158 = vpop.permute.xlu0 %1157
      %1159 = vrot.lane.b32.xlu0 %v464, 16
      %v1160 = vpop.permute.xlu0 %1159
      %1161 = vrot.lane.b32.xlu0 %v465, 16
      %v1162 = vpop.permute.xlu0 %1161
      %1163 = vrot.lane.b32.xlu0 %v466, 16
      %v1164 = vpop.permute.xlu0 %1163
      %1165 = vrot.lane.b32.xlu0 %v467, 16
      %v1166 = vpop.permute.xlu0 %1165
      %1167 = vrot.lane.b32.xlu0 %v468, 16
      %v1168 = vpop.permute.xlu0 %1167
      %1169 = vrot.lane.b32.xlu0 %v469, 16
      %v1170 = vpop.permute.xlu0 %1169
      %1171 = vrot.lane.b32.xlu0 %v470, 16
      %v1172 = vpop.permute.xlu0 %1171
      %1173 = vrot.lane.b32.xlu0 %v471, 16
      %v1174 = vpop.permute.xlu0 %1173
      %1175 = vrot.lane.b32.xlu0 %v472, 16
      %v1176 = vpop.permute.xlu0 %1175
      %1177 = vrot.lane.b32.xlu0 %v473, 16
      %v1178 = vpop.permute.xlu0 %1177
      %1179 = vrot.lane.b32.xlu0 %v474, 16
      %v1180 = vpop.permute.xlu0 %1179
      %1181 = vrot.lane.b32.xlu0 %v475, 16
      %v1182 = vpop.permute.xlu0 %1181
      %1183 = vrot.lane.b32.xlu0 %v476, 16
      %v1184 = vpop.permute.xlu0 %1183
      %1185 = vrot.lane.b32.xlu0 %v477, 16
      %v1186 = vpop.permute.xlu0 %1185
      %1187 = vrot.lane.b32.xlu0 %v478, 16
      %v1188 = vpop.permute.xlu0 %1187
      %1189 = vrot.lane.b32.xlu0 %v479, 16
      %v1190 = vpop.permute.xlu0 %1189
      %1191 = vrot.lane.b32.xlu0 %v480, 16
      %v1192 = vpop.permute.xlu0 %1191
      %1193 = vrot.lane.b32.xlu0 %v481, 16
      %v1194 = vpop.permute.xlu0 %1193
      %1195 = vrot.lane.b32.xlu0 %v705, 16
      %v1196 = vpop.permute.xlu0 %1195
      %1197 = vrot.lane.b32.xlu0 %v706, 16
      %v1198 = vpop.permute.xlu0 %1197
      %1233 = vrot.lane.b32.xlu0 %v629, 20
      %v1234 = vpop.permute.xlu0 %1233
      %1235 = vrot.lane.b32.xlu0 %v630, 20
      %v1236 = vpop.permute.xlu0 %1235
      %1237 = vrot.lane.b32.xlu0 %v631, 20
      %v1238 = vpop.permute.xlu0 %1237
      %1239 = vrot.lane.b32.xlu0 %v632, 20
      %v1240 = vpop.permute.xlu0 %1239
      %1241 = vrot.lane.b32.xlu0 %v633, 20
      %v1242 = vpop.permute.xlu0 %1241
      %1243 = vrot.lane.b32.xlu0 %v634, 20
      %v1244 = vpop.permute.xlu0 %1243
      %1245 = vrot.lane.b32.xlu0 %v635, 20
      %v1246 = vpop.permute.xlu0 %1245
      %1247 = vrot.lane.b32.xlu0 %v636, 20
      %v1248 = vpop.permute.xlu0 %1247
      %1249 = vrot.lane.b32.xlu0 %v637, 20
      %v1250 = vpop.permute.xlu0 %1249
      %1251 = vrot.lane.b32.xlu0 %v638, 20
      %v1252 = vpop.permute.xlu0 %1251
      %1253 = vrot.lane.b32.xlu0 %v639, 20
      %v1254 = vpop.permute.xlu0 %1253
      %1255 = vrot.lane.b32.xlu0 %v640, 20
      %v1256 = vpop.permute.xlu0 %1255
      %1257 = vrot.lane.b32.xlu0 %v641, 20
      %v1258 = vpop.permute.xlu0 %1257
      %1259 = vrot.lane.b32.xlu0 %v642, 20
      %v1260 = vpop.permute.xlu0 %1259
      %1261 = vrot.lane.b32.xlu0 %v643, 20
      %v1262 = vpop.permute.xlu0 %1261
      %1263 = vrot.lane.b32.xlu0 %v644, 20
      %v1264 = vpop.permute.xlu0 %1263
      %1265 = vrot.lane.b32.xlu0 %v645, 20
      %v1266 = vpop.permute.xlu0 %1265
      %1267 = vrot.lane.b32.xlu0 %v646, 20
      %v1268 = vpop.permute.xlu0 %1267
      %1269 = vrot.lane.b32.xlu0 %v647, 20
      %v1270 = vpop.permute.xlu0 %1269
      %1271 = vrot.lane.b32.xlu0 %v648, 20
      %v1272 = vpop.permute.xlu0 %1271
      %1273 = vrot.lane.b32.xlu0 %v649, 20
      %v1274 = vpop.permute.xlu0 %1273
      %1275 = vrot.lane.b32.xlu0 %v650, 20
      %v1276 = vpop.permute.xlu0 %1275
      %1277 = vrot.lane.b32.xlu0 %v651, 20
      %v1278 = vpop.permute.xlu0 %1277
      %1279 = vrot.lane.b32.xlu0 %v652, 20
      %v1280 = vpop.permute.xlu0 %1279
      %1281 = vrot.lane.b32.xlu0 %v653, 20
      %v1282 = vpop.permute.xlu0 %1281
      %1283 = vrot.lane.b32.xlu0 %v654, 20
      %v1284 = vpop.permute.xlu0 %1283
      %1285 = vrot.lane.b32.xlu0 %v655, 20
      %v1286 = vpop.permute.xlu0 %1285
      %1287 = vrot.lane.b32.xlu0 %v656, 20
      %v1288 = vpop.permute.xlu0 %1287
      %1289 = vrot.lane.b32.xlu0 %v657, 20
      %v1290 = vpop.permute.xlu0 %1289
      %1291 = vrot.lane.b32.xlu0 %v658, 20
      %v1292 = vpop.permute.xlu0 %1291
      %1293 = vrot.lane.b32.xlu0 %v716, 20
      %v1294 = vpop.permute.xlu0 %1293
      %1295 = vrot.lane.b32.xlu0 %v717, 20
      %v1296 = vpop.permute.xlu0 %1295
      %1331 = vrot.lane.b32.xlu0 %v229, 24
      %v1332 = vpop.permute.xlu0 %1331
      %1333 = vrot.lane.b32.xlu0 %v230, 24
      %v1334 = vpop.permute.xlu0 %1333
      %1335 = vrot.lane.b32.xlu0 %v231, 24
      %v1336 = vpop.permute.xlu0 %1335
      %1337 = vrot.lane.b32.xlu0 %v232, 24
      %v1338 = vpop.permute.xlu0 %1337
      %1339 = vrot.lane.b32.xlu0 %v233, 24
      %v1340 = vpop.permute.xlu0 %1339
      %1341 = vrot.lane.b32.xlu0 %v234, 24
      %v1342 = vpop.permute.xlu0 %1341
      %1343 = vrot.lane.b32.xlu0 %v235, 24
      %v1344 = vpop.permute.xlu0 %1343
      %1345 = vrot.lane.b32.xlu0 %v236, 24
      %v1346 = vpop.permute.xlu0 %1345
      %1347 = vrot.lane.b32.xlu0 %v237, 24
      %v1348 = vpop.permute.xlu0 %1347
      %1349 = vrot.lane.b32.xlu0 %v238, 24
      %v1350 = vpop.permute.xlu0 %1349
      %1351 = vrot.lane.b32.xlu0 %v239, 24
      %v1352 = vpop.permute.xlu0 %1351
      %1353 = vrot.lane.b32.xlu0 %v240, 24
      %v1354 = vpop.permute.xlu0 %1353
      %1355 = vrot.lane.b32.xlu0 %v241, 24
      %v1356 = vpop.permute.xlu0 %1355
      %1357 = vrot.lane.b32.xlu0 %v242, 24
      %v1358 = vpop.permute.xlu0 %1357
      %1359 = vrot.lane.b32.xlu0 %v243, 24
      %v1360 = vpop.permute.xlu0 %1359
      %1361 = vrot.lane.b32.xlu0 %v244, 24
      %v1362 = vpop.permute.xlu0 %1361
      %1363 = vrot.lane.b32.xlu0 %v245, 24
      %v1364 = vpop.permute.xlu0 %1363
      %1365 = vrot.lane.b32.xlu0 %v246, 24
      %v1366 = vpop.permute.xlu0 %1365
      %1367 = vrot.lane.b32.xlu0 %v247, 24
      %v1368 = vpop.permute.xlu0 %1367
      %1369 = vrot.lane.b32.xlu0 %v248, 24
      %v1370 = vpop.permute.xlu0 %1369
      %1371 = vrot.lane.b32.xlu0 %v249, 24
      %v1372 = vpop.permute.xlu0 %1371
      %1373 = vrot.lane.b32.xlu0 %v250, 24
      %v1374 = vpop.permute.xlu0 %1373
      %1375 = vrot.lane.b32.xlu0 %v251, 24
      %v1376 = vpop.permute.xlu0 %1375
      %1377 = vrot.lane.b32.xlu0 %v252, 24
      %v1378 = vpop.permute.xlu0 %1377
      %1379 = vrot.lane.b32.xlu0 %v253, 24
      %v1380 = vpop.permute.xlu0 %1379
      %1381 = vrot.lane.b32.xlu0 %v254, 24
      %v1382 = vpop.permute.xlu0 %1381
      %1383 = vrot.lane.b32.xlu0 %v255, 24
      %v1384 = vpop.permute.xlu0 %1383
      %1385 = vrot.lane.b32.xlu0 %v256, 24
      %v1386 = vpop.permute.xlu0 %1385
      %1387 = vrot.lane.b32.xlu0 %v691, 24
      %v1388 = vpop.permute.xlu0 %1387
      %1389 = vrot.lane.b32.xlu0 %v692, 24
      %v1390 = vpop.permute.xlu0 %1389
      %1391 = vrot.lane.b32.xlu0 %v720, 24
      %v1392 = vpop.permute.xlu0 %1391
      %1393 = vrot.lane.b32.xlu0 %v721, 24
      %v1394 = vpop.permute.xlu0 %1393
      %1429 = vrot.lane.b32.xlu0 %v454, 28
      %v1430 = vpop.permute.xlu0 %1429
      %1431 = vrot.lane.b32.xlu0 %v455, 28
      %v1432 = vpop.permute.xlu0 %1431
      %1433 = vrot.lane.b32.xlu0 %v456, 28
      %v1434 = vpop.permute.xlu0 %1433
      %1435 = vrot.lane.b32.xlu0 %v457, 28
      %v1436 = vpop.permute.xlu0 %1435
      %1437 = vrot.lane.b32.xlu0 %v458, 28
      %v1438 = vpop.permute.xlu0 %1437
      %1439 = vrot.lane.b32.xlu0 %v459, 28
      %v1440 = vpop.permute.xlu0 %1439
      %1441 = vrot.lane.b32.xlu0 %v460, 28
      %v1442 = vpop.permute.xlu0 %1441
      %1443 = vrot.lane.b32.xlu0 %v461, 28
      %v1444 = vpop.permute.xlu0 %1443
      %1445 = vrot.lane.b32.xlu0 %v462, 28
      %v1446 = vpop.permute.xlu0 %1445
      %1447 = vrot.lane.b32.xlu0 %v463, 28
      %v1448 = vpop.permute.xlu0 %1447
      %1449 = vrot.lane.b32.xlu0 %v464, 28
      %v1450 = vpop.permute.xlu0 %1449
      %1451 = vrot.lane.b32.xlu0 %v465, 28
      %v1452 = vpop.permute.xlu0 %1451
      %1453 = vrot.lane.b32.xlu0 %v466, 28
      %v1454 = vpop.permute.xlu0 %1453
      %1455 = vrot.lane.b32.xlu0 %v467, 28
      %v1456 = vpop.permute.xlu0 %1455
      %1457 = vrot.lane.b32.xlu0 %v468, 28
      %v1458 = vpop.permute.xlu0 %1457
      %1459 = vrot.lane.b32.xlu0 %v469, 28
      %v1460 = vpop.permute.xlu0 %1459
      %1461 = vrot.lane.b32.xlu0 %v470, 28
      %v1462 = vpop.permute.xlu0 %1461
      %1463 = vrot.lane.b32.xlu0 %v471, 28
      %v1464 = vpop.permute.xlu0 %1463
      %1465 = vrot.lane.b32.xlu0 %v472, 28
      %v1466 = vpop.permute.xlu0 %1465
      %1467 = vrot.lane.b32.xlu0 %v473, 28
      %v1468 = vpop.permute.xlu0 %1467
      %1469 = vrot.lane.b32.xlu0 %v474, 28
      %v1470 = vpop.permute.xlu0 %1469
      %1471 = vrot.lane.b32.xlu0 %v475, 28
      %v1472 = vpop.permute.xlu0 %1471
      %1473 = vrot.lane.b32.xlu0 %v476, 28
      %v1474 = vpop.permute.xlu0 %1473
      %1475 = vrot.lane.b32.xlu0 %v477, 28
      %v1476 = vpop.permute.xlu0 %1475
      %1477 = vrot.lane.b32.xlu0 %v478, 28
      %v1478 = vpop.permute.xlu0 %1477
      %1479 = vrot.lane.b32.xlu0 %v479, 28
      %v1480 = vpop.permute.xlu0 %1479
      %1481 = vrot.lane.b32.xlu0 %v480, 28
      %v1482 = vpop.permute.xlu0 %1481
      %1483 = vrot.lane.b32.xlu0 %v481, 28
      %v1484 = vpop.permute.xlu0 %1483
      %1485 = vrot.lane.b32.xlu0 %v705, 28
      %v1486 = vpop.permute.xlu0 %1485
      %1487 = vrot.lane.b32.xlu0 %v706, 28
      %v1488 = vpop.permute.xlu0 %1487
      %1489 = vrot.lane.b32.xlu0 %v734, 28
      %v1490 = vpop.permute.xlu0 %1489
      %1491 = vrot.lane.b32.xlu0 %v735, 28
      %v1492 = vpop.permute.xlu0 %1491
      %1527 = vrot.lane.b32.xlu0 %v631, 32
      %v1528 = vpop.permute.xlu0 %1527
      %1529 = vrot.lane.b32.xlu0 %v632, 32
      %v1530 = vpop.permute.xlu0 %1529
      %1531 = vrot.lane.b32.xlu0 %v633, 32
      %v1532 = vpop.permute.xlu0 %1531
      %1533 = vrot.lane.b32.xlu0 %v634, 32
      %v1534 = vpop.permute.xlu0 %1533
      %1535 = vrot.lane.b32.xlu0 %v635, 32
      %v1536 = vpop.permute.xlu0 %1535
      %1537 = vrot.lane.b32.xlu0 %v636, 32
      %v1538 = vpop.permute.xlu0 %1537
      %1539 = vrot.lane.b32.xlu0 %v637, 32
      %v1540 = vpop.permute.xlu0 %1539
      %1541 = vrot.lane.b32.xlu0 %v638, 32
      %v1542 = vpop.permute.xlu0 %1541
      %1543 = vrot.lane.b32.xlu0 %v639, 32
      %v1544 = vpop.permute.xlu0 %1543
      %1545 = vrot.lane.b32.xlu0 %v640, 32
      %v1546 = vpop.permute.xlu0 %1545
      %1547 = vrot.lane.b32.xlu0 %v641, 32
      %v1548 = vpop.permute.xlu0 %1547
      %1549 = vrot.lane.b32.xlu0 %v642, 32
      %v1550 = vpop.permute.xlu0 %1549
      %1551 = vrot.lane.b32.xlu0 %v643, 32
      %v1552 = vpop.permute.xlu0 %1551
      %1553 = vrot.lane.b32.xlu0 %v644, 32
      %v1554 = vpop.permute.xlu0 %1553
      %1555 = vrot.lane.b32.xlu0 %v645, 32
      %v1556 = vpop.permute.xlu0 %1555
      %1557 = vrot.lane.b32.xlu0 %v646, 32
      %v1558 = vpop.permute.xlu0 %1557
      %1559 = vrot.lane.b32.xlu0 %v647, 32
      %v1560 = vpop.permute.xlu0 %1559
      %1561 = vrot.lane.b32.xlu0 %v648, 32
      %v1562 = vpop.permute.xlu0 %1561
      %1563 = vrot.lane.b32.xlu0 %v649, 32
      %v1564 = vpop.permute.xlu0 %1563
      %1565 = vrot.lane.b32.xlu0 %v650, 32
      %v1566 = vpop.permute.xlu0 %1565
      %1567 = vrot.lane.b32.xlu0 %v651, 32
      %v1568 = vpop.permute.xlu0 %1567
      %1569 = vrot.lane.b32.xlu0 %v652, 32
      %v1570 = vpop.permute.xlu0 %1569
      %1571 = vrot.lane.b32.xlu0 %v653, 32
      %v1572 = vpop.permute.xlu0 %1571
      %1573 = vrot.lane.b32.xlu0 %v654, 32
      %v1574 = vpop.permute.xlu0 %1573
      %1575 = vrot.lane.b32.xlu0 %v655, 32
      %v1576 = vpop.permute.xlu0 %1575
      %1577 = vrot.lane.b32.xlu0 %v656, 32
      %v1578 = vpop.permute.xlu0 %1577
      %1579 = vrot.lane.b32.xlu0 %v657, 32
      %v1580 = vpop.permute.xlu0 %1579
      %1581 = vrot.lane.b32.xlu0 %v658, 32
      %v1582 = vpop.permute.xlu0 %1581
      %1583 = vrot.lane.b32.xlu0 %v716, 32
      %v1584 = vpop.permute.xlu0 %1583
      %1585 = vrot.lane.b32.xlu0 %v717, 32
      %v1586 = vpop.permute.xlu0 %1585
      %1587 = vrot.lane.b32.xlu0 %v745, 32
      %v1588 = vpop.permute.xlu0 %1587
      %1589 = vrot.lane.b32.xlu0 %v746, 32
      %v1590 = vpop.permute.xlu0 %1589
      %1655 = vrot.lane.b32.xlu0 %v257, 36
      %v1656 = vpop.permute.xlu0 %1655
      %1657 = vrot.lane.b32.xlu0 %v258, 36
      %v1658 = vpop.permute.xlu0 %1657
      %1659 = vrot.lane.b32.xlu0 %v259, 36
      %v1660 = vpop.permute.xlu0 %1659
      %1661 = vrot.lane.b32.xlu0 %v260, 36
      %v1662 = vpop.permute.xlu0 %1661
      %1663 = vrot.lane.b32.xlu0 %v261, 36
      %v1664 = vpop.permute.xlu0 %1663
      %1665 = vrot.lane.b32.xlu0 %v262, 36
      %v1666 = vpop.permute.xlu0 %1665
      %1667 = vrot.lane.b32.xlu0 %v263, 36
      %v1668 = vpop.permute.xlu0 %1667
      %1669 = vrot.lane.b32.xlu0 %v264, 36
      %v1670 = vpop.permute.xlu0 %1669
      %1671 = vrot.lane.b32.xlu0 %v265, 36
      %v1672 = vpop.permute.xlu0 %1671
      %1673 = vrot.lane.b32.xlu0 %v266, 36
      %v1674 = vpop.permute.xlu0 %1673
      %1675 = vrot.lane.b32.xlu0 %v267, 36
      %v1676 = vpop.permute.xlu0 %1675
      %1677 = vrot.lane.b32.xlu0 %v268, 36
      %v1678 = vpop.permute.xlu0 %1677
      %1679 = vrot.lane.b32.xlu0 %v269, 36
      %v1680 = vpop.permute.xlu0 %1679
      %1681 = vrot.lane.b32.xlu0 %v270, 36
      %v1682 = vpop.permute.xlu0 %1681
      %1683 = vrot.lane.b32.xlu0 %v271, 36
      %v1684 = vpop.permute.xlu0 %1683
      %1685 = vrot.lane.b32.xlu0 %v272, 36
      %v1686 = vpop.permute.xlu0 %1685
      %1687 = vrot.lane.b32.xlu0 %v273, 36
      %v1688 = vpop.permute.xlu0 %1687
      %1689 = vrot.lane.b32.xlu0 %v274, 36
      %v1690 = vpop.permute.xlu0 %1689
      %1691 = vrot.lane.b32.xlu0 %v275, 36
      %v1692 = vpop.permute.xlu0 %1691
      %1693 = vrot.lane.b32.xlu0 %v276, 36
      %v1694 = vpop.permute.xlu0 %1693
      %1695 = vrot.lane.b32.xlu0 %v277, 36
      %v1696 = vpop.permute.xlu0 %1695
      %1697 = vrot.lane.b32.xlu0 %v278, 36
      %v1698 = vpop.permute.xlu0 %1697
      %1699 = vrot.lane.b32.xlu0 %v279, 36
      %v1700 = vpop.permute.xlu0 %1699
      %1701 = vrot.lane.b32.xlu0 %v280, 36
      %v1702 = vpop.permute.xlu0 %1701
      %1703 = vrot.lane.b32.xlu0 %v281, 36
      %v1704 = vpop.permute.xlu0 %1703
      %1705 = vrot.lane.b32.xlu0 %v282, 36
      %v1706 = vpop.permute.xlu0 %1705
      %1707 = vrot.lane.b32.xlu0 %v283, 36
      %v1708 = vpop.permute.xlu0 %1707
      %1709 = vrot.lane.b32.xlu0 %v284, 36
      %v1710 = vpop.permute.xlu0 %1709
      %1711 = vrot.lane.b32.xlu0 %v285, 36
      %v1712 = vpop.permute.xlu0 %1711
      %1713 = vrot.lane.b32.xlu0 %v286, 36
      %v1714 = vpop.permute.xlu0 %1713
      %1715 = vrot.lane.b32.xlu0 %v287, 36
      %v1716 = vpop.permute.xlu0 %1715
      %1717 = vrot.lane.b32.xlu0 %v288, 36
      %v1718 = vpop.permute.xlu0 %1717
      %1783 = vrot.lane.b32.xlu0 %v482, 40
      %v1784 = vpop.permute.xlu0 %1783
      %1785 = vrot.lane.b32.xlu0 %v483, 40
      %v1786 = vpop.permute.xlu0 %1785
      %1787 = vrot.lane.b32.xlu0 %v484, 40
      %v1788 = vpop.permute.xlu0 %1787
      %1789 = vrot.lane.b32.xlu0 %v485, 40
      %v1790 = vpop.permute.xlu0 %1789
      %1791 = vrot.lane.b32.xlu0 %v486, 40
      %v1792 = vpop.permute.xlu0 %1791
      %1793 = vrot.lane.b32.xlu0 %v487, 40
      %v1794 = vpop.permute.xlu0 %1793
      %1795 = vrot.lane.b32.xlu0 %v488, 40
      %v1796 = vpop.permute.xlu0 %1795
      %1797 = vrot.lane.b32.xlu0 %v489, 40
      %v1798 = vpop.permute.xlu0 %1797
      %1799 = vrot.lane.b32.xlu0 %v490, 40
      %v1800 = vpop.permute.xlu0 %1799
      %1801 = vrot.lane.b32.xlu0 %v491, 40
      %v1802 = vpop.permute.xlu0 %1801
      %1803 = vrot.lane.b32.xlu0 %v492, 40
      %v1804 = vpop.permute.xlu0 %1803
      %1805 = vrot.lane.b32.xlu0 %v493, 40
      %v1806 = vpop.permute.xlu0 %1805
      %1807 = vrot.lane.b32.xlu0 %v494, 40
      %v1808 = vpop.permute.xlu0 %1807
      %1809 = vrot.lane.b32.xlu0 %v495, 40
      %v1810 = vpop.permute.xlu0 %1809
      %1811 = vrot.lane.b32.xlu0 %v496, 40
      %v1812 = vpop.permute.xlu0 %1811
      %1813 = vrot.lane.b32.xlu0 %v497, 40
      %v1814 = vpop.permute.xlu0 %1813
      %1815 = vrot.lane.b32.xlu0 %v498, 40
      %v1816 = vpop.permute.xlu0 %1815
      %1817 = vrot.lane.b32.xlu0 %v499, 40
      %v1818 = vpop.permute.xlu0 %1817
      %1819 = vrot.lane.b32.xlu0 %v500, 40
      %v1820 = vpop.permute.xlu0 %1819
      %1821 = vrot.lane.b32.xlu0 %v501, 40
      %v1822 = vpop.permute.xlu0 %1821
      %1823 = vrot.lane.b32.xlu0 %v502, 40
      %v1824 = vpop.permute.xlu0 %1823
      %1825 = vrot.lane.b32.xlu0 %v503, 40
      %v1826 = vpop.permute.xlu0 %1825
      %1827 = vrot.lane.b32.xlu0 %v504, 40
      %v1828 = vpop.permute.xlu0 %1827
      %1829 = vrot.lane.b32.xlu0 %v505, 40
      %v1830 = vpop.permute.xlu0 %1829
      %1831 = vrot.lane.b32.xlu0 %v506, 40
      %v1832 = vpop.permute.xlu0 %1831
      %1833 = vrot.lane.b32.xlu0 %v507, 40
      %v1834 = vpop.permute.xlu0 %1833
      %1835 = vrot.lane.b32.xlu0 %v508, 40
      %v1836 = vpop.permute.xlu0 %1835
      %1837 = vrot.lane.b32.xlu0 %v509, 40
      %v1838 = vpop.permute.xlu0 %1837
      %1839 = vrot.lane.b32.xlu0 %v510, 40
      %v1840 = vpop.permute.xlu0 %1839
      %1841 = vrot.lane.b32.xlu0 %v511, 40
      %v1842 = vpop.permute.xlu0 %1841
      %1843 = vrot.lane.b32.xlu0 %v512, 40
      %v1844 = vpop.permute.xlu0 %1843
      %1845 = vrot.lane.b32.xlu0 %v513, 40
      %v1846 = vpop.permute.xlu0 %1845
      %1911 = vrot.lane.b32.xlu0 %v659, 44
      %v1912 = vpop.permute.xlu0 %1911
      %1913 = vrot.lane.b32.xlu0 %v660, 44
      %v1914 = vpop.permute.xlu0 %1913
      %1915 = vrot.lane.b32.xlu0 %v661, 44
      %v1916 = vpop.permute.xlu0 %1915
      %1917 = vrot.lane.b32.xlu0 %v662, 44
      %v1918 = vpop.permute.xlu0 %1917
      %1919 = vrot.lane.b32.xlu0 %v663, 44
      %v1920 = vpop.permute.xlu0 %1919
      %1921 = vrot.lane.b32.xlu0 %v664, 44
      %v1922 = vpop.permute.xlu0 %1921
      %1923 = vrot.lane.b32.xlu0 %v665, 44
      %v1924 = vpop.permute.xlu0 %1923
      %1925 = vrot.lane.b32.xlu0 %v666, 44
      %v1926 = vpop.permute.xlu0 %1925
      %1927 = vrot.lane.b32.xlu0 %v667, 44
      %v1928 = vpop.permute.xlu0 %1927
      %1929 = vrot.lane.b32.xlu0 %v668, 44
      %v1930 = vpop.permute.xlu0 %1929
      %1931 = vrot.lane.b32.xlu0 %v669, 44
      %v1932 = vpop.permute.xlu0 %1931
      %1933 = vrot.lane.b32.xlu0 %v670, 44
      %v1934 = vpop.permute.xlu0 %1933
      %1935 = vrot.lane.b32.xlu0 %v671, 44
      %v1936 = vpop.permute.xlu0 %1935
      %1937 = vrot.lane.b32.xlu0 %v672, 44
      %v1938 = vpop.permute.xlu0 %1937
      %1939 = vrot.lane.b32.xlu0 %v673, 44
      %v1940 = vpop.permute.xlu0 %1939
      %1941 = vrot.lane.b32.xlu0 %v674, 44
      %v1942 = vpop.permute.xlu0 %1941
      %1943 = vrot.lane.b32.xlu0 %v675, 44
      %v1944 = vpop.permute.xlu0 %1943
      %1945 = vrot.lane.b32.xlu0 %v676, 44
      %v1946 = vpop.permute.xlu0 %1945
      %1947 = vrot.lane.b32.xlu0 %v677, 44
      %v1948 = vpop.permute.xlu0 %1947
      %1949 = vrot.lane.b32.xlu0 %v678, 44
      %v1950 = vpop.permute.xlu0 %1949
      %1951 = vrot.lane.b32.xlu0 %v679, 44
      %v1952 = vpop.permute.xlu0 %1951
      %1953 = vrot.lane.b32.xlu0 %v680, 44
      %v1954 = vpop.permute.xlu0 %1953
      %1955 = vrot.lane.b32.xlu0 %v681, 44
      %v1956 = vpop.permute.xlu0 %1955
      %1957 = vrot.lane.b32.xlu0 %v682, 44
      %v1958 = vpop.permute.xlu0 %1957
      %1959 = vrot.lane.b32.xlu0 %v683, 44
      %v1960 = vpop.permute.xlu0 %1959
      %1961 = vrot.lane.b32.xlu0 %v684, 44
      %v1962 = vpop.permute.xlu0 %1961
      %1963 = vrot.lane.b32.xlu0 %v685, 44
      %v1964 = vpop.permute.xlu0 %1963
      %1965 = vrot.lane.b32.xlu0 %v686, 44
      %v1966 = vpop.permute.xlu0 %1965
      %1967 = vrot.lane.b32.xlu0 %v687, 44
      %v1968 = vpop.permute.xlu0 %1967
      %1969 = vrot.lane.b32.xlu0 %v688, 44
      %v1970 = vpop.permute.xlu0 %1969
      %1971 = vrot.lane.b32.xlu0 %v689, 44
      %v1972 = vpop.permute.xlu0 %1971
      %1973 = vrot.lane.b32.xlu0 %v690, 44
      %v1974 = vpop.permute.xlu0 %1973
      %2009 = vrot.lane.b32.xlu0 %v259, 48
      %v2010 = vpop.permute.xlu0 %2009
      %2011 = vrot.lane.b32.xlu0 %v260, 48
      %v2012 = vpop.permute.xlu0 %2011
      %2013 = vrot.lane.b32.xlu0 %v261, 48
      %v2014 = vpop.permute.xlu0 %2013
      %2015 = vrot.lane.b32.xlu0 %v262, 48
      %v2016 = vpop.permute.xlu0 %2015
      %2017 = vrot.lane.b32.xlu0 %v263, 48
      %v2018 = vpop.permute.xlu0 %2017
      %2019 = vrot.lane.b32.xlu0 %v264, 48
      %v2020 = vpop.permute.xlu0 %2019
      %2021 = vrot.lane.b32.xlu0 %v265, 48
      %v2022 = vpop.permute.xlu0 %2021
      %2023 = vrot.lane.b32.xlu0 %v266, 48
      %v2024 = vpop.permute.xlu0 %2023
      %2025 = vrot.lane.b32.xlu0 %v267, 48
      %v2026 = vpop.permute.xlu0 %2025
      %2027 = vrot.lane.b32.xlu0 %v268, 48
      %v2028 = vpop.permute.xlu0 %2027
      %2029 = vrot.lane.b32.xlu0 %v269, 48
      %v2030 = vpop.permute.xlu0 %2029
      %2031 = vrot.lane.b32.xlu0 %v270, 48
      %v2032 = vpop.permute.xlu0 %2031
      %2033 = vrot.lane.b32.xlu0 %v271, 48
      %v2034 = vpop.permute.xlu0 %2033
      %2035 = vrot.lane.b32.xlu0 %v272, 48
      %v2036 = vpop.permute.xlu0 %2035
      %2037 = vrot.lane.b32.xlu0 %v273, 48
      %v2038 = vpop.permute.xlu0 %2037
      %2039 = vrot.lane.b32.xlu0 %v274, 48
      %v2040 = vpop.permute.xlu0 %2039
      %2041 = vrot.lane.b32.xlu0 %v275, 48
      %v2042 = vpop.permute.xlu0 %2041
      %2043 = vrot.lane.b32.xlu0 %v276, 48
      %v2044 = vpop.permute.xlu0 %2043
      %2045 = vrot.lane.b32.xlu0 %v277, 48
      %v2046 = vpop.permute.xlu0 %2045
      %2047 = vrot.lane.b32.xlu0 %v278, 48
      %v2048 = vpop.permute.xlu0 %2047
      %2049 = vrot.lane.b32.xlu0 %v279, 48
      %v2050 = vpop.permute.xlu0 %2049
      %2051 = vrot.lane.b32.xlu0 %v280, 48
      %v2052 = vpop.permute.xlu0 %2051
      %2053 = vrot.lane.b32.xlu0 %v281, 48
      %v2054 = vpop.permute.xlu0 %2053
      %2055 = vrot.lane.b32.xlu0 %v282, 48
      %v2056 = vpop.permute.xlu0 %2055
      %2057 = vrot.lane.b32.xlu0 %v283, 48
      %v2058 = vpop.permute.xlu0 %2057
      %2059 = vrot.lane.b32.xlu0 %v284, 48
      %v2060 = vpop.permute.xlu0 %2059
      %2061 = vrot.lane.b32.xlu0 %v285, 48
      %v2062 = vpop.permute.xlu0 %2061
      %2063 = vrot.lane.b32.xlu0 %v286, 48
      %v2064 = vpop.permute.xlu0 %2063
      %2065 = vrot.lane.b32.xlu0 %v287, 48
      %v2066 = vpop.permute.xlu0 %2065
      %2067 = vrot.lane.b32.xlu0 %v288, 48
      %v2068 = vpop.permute.xlu0 %2067
      %2069 = vrot.lane.b32.xlu0 %v693, 48
      %v2070 = vpop.permute.xlu0 %2069
      %2071 = vrot.lane.b32.xlu0 %v694, 48
      %v2072 = vpop.permute.xlu0 %2071
      %2107 = vrot.lane.b32.xlu0 %v484, 52
      %v2108 = vpop.permute.xlu0 %2107
      %2109 = vrot.lane.b32.xlu0 %v485, 52
      %v2110 = vpop.permute.xlu0 %2109
      %2111 = vrot.lane.b32.xlu0 %v486, 52
      %v2112 = vpop.permute.xlu0 %2111
      %2113 = vrot.lane.b32.xlu0 %v487, 52
      %v2114 = vpop.permute.xlu0 %2113
      %2115 = vrot.lane.b32.xlu0 %v488, 52
      %v2116 = vpop.permute.xlu0 %2115
      %2117 = vrot.lane.b32.xlu0 %v489, 52
      %v2118 = vpop.permute.xlu0 %2117
      %2119 = vrot.lane.b32.xlu0 %v490, 52
      %v2120 = vpop.permute.xlu0 %2119
      %2121 = vrot.lane.b32.xlu0 %v491, 52
      %v2122 = vpop.permute.xlu0 %2121
      %2123 = vrot.lane.b32.xlu0 %v492, 52
      %v2124 = vpop.permute.xlu0 %2123
      %2125 = vrot.lane.b32.xlu0 %v493, 52
      %v2126 = vpop.permute.xlu0 %2125
      %2127 = vrot.lane.b32.xlu0 %v494, 52
      %v2128 = vpop.permute.xlu0 %2127
      %2129 = vrot.lane.b32.xlu0 %v495, 52
      %v2130 = vpop.permute.xlu0 %2129
      %2131 = vrot.lane.b32.xlu0 %v496, 52
      %v2132 = vpop.permute.xlu0 %2131
      %2133 = vrot.lane.b32.xlu0 %v497, 52
      %v2134 = vpop.permute.xlu0 %2133
      %2135 = vrot.lane.b32.xlu0 %v498, 52
      %v2136 = vpop.permute.xlu0 %2135
      %2137 = vrot.lane.b32.xlu0 %v499, 52
      %v2138 = vpop.permute.xlu0 %2137
      %2139 = vrot.lane.b32.xlu0 %v500, 52
      %v2140 = vpop.permute.xlu0 %2139
      %2141 = vrot.lane.b32.xlu0 %v501, 52
      %v2142 = vpop.permute.xlu0 %2141
      %2143 = vrot.lane.b32.xlu0 %v502, 52
      %v2144 = vpop.permute.xlu0 %2143
      %2145 = vrot.lane.b32.xlu0 %v503, 52
      %v2146 = vpop.permute.xlu0 %2145
      %2147 = vrot.lane.b32.xlu0 %v504, 52
      %v2148 = vpop.permute.xlu0 %2147
      %2149 = vrot.lane.b32.xlu0 %v505, 52
      %v2150 = vpop.permute.xlu0 %2149
      %2151 = vrot.lane.b32.xlu0 %v506, 52
      %v2152 = vpop.permute.xlu0 %2151
      %2153 = vrot.lane.b32.xlu0 %v507, 52
      %v2154 = vpop.permute.xlu0 %2153
      %2155 = vrot.lane.b32.xlu0 %v508, 52
      %v2156 = vpop.permute.xlu0 %2155
      %2157 = vrot.lane.b32.xlu0 %v509, 52
      %v2158 = vpop.permute.xlu0 %2157
      %2159 = vrot.lane.b32.xlu0 %v510, 52
      %v2160 = vpop.permute.xlu0 %2159
      %2161 = vrot.lane.b32.xlu0 %v511, 52
      %v2162 = vpop.permute.xlu0 %2161
      %2163 = vrot.lane.b32.xlu0 %v512, 52
      %v2164 = vpop.permute.xlu0 %2163
      %2165 = vrot.lane.b32.xlu0 %v513, 52
      %v2166 = vpop.permute.xlu0 %2165
      %2167 = vrot.lane.b32.xlu0 %v707, 52
      %v2168 = vpop.permute.xlu0 %2167
      %2169 = vrot.lane.b32.xlu0 %v708, 52
      %v2170 = vpop.permute.xlu0 %2169
      %2205 = vrot.lane.b32.xlu0 %v661, 56
      %v2206 = vpop.permute.xlu0 %2205
      %2207 = vrot.lane.b32.xlu0 %v662, 56
      %v2208 = vpop.permute.xlu0 %2207
      %2209 = vrot.lane.b32.xlu0 %v663, 56
      %v2210 = vpop.permute.xlu0 %2209
      %2211 = vrot.lane.b32.xlu0 %v664, 56
      %v2212 = vpop.permute.xlu0 %2211
      %2213 = vrot.lane.b32.xlu0 %v665, 56
      %v2214 = vpop.permute.xlu0 %2213
      %2215 = vrot.lane.b32.xlu0 %v666, 56
      %v2216 = vpop.permute.xlu0 %2215
      %2217 = vrot.lane.b32.xlu0 %v667, 56
      %v2218 = vpop.permute.xlu0 %2217
      %2219 = vrot.lane.b32.xlu0 %v668, 56
      %v2220 = vpop.permute.xlu0 %2219
      %2221 = vrot.lane.b32.xlu0 %v669, 56
      %v2222 = vpop.permute.xlu0 %2221
      %2223 = vrot.lane.b32.xlu0 %v670, 56
      %v2224 = vpop.permute.xlu0 %2223
      %2225 = vrot.lane.b32.xlu0 %v671, 56
      %v2226 = vpop.permute.xlu0 %2225
      %2227 = vrot.lane.b32.xlu0 %v672, 56
      %v2228 = vpop.permute.xlu0 %2227
      %2229 = vrot.lane.b32.xlu0 %v673, 56
      %v2230 = vpop.permute.xlu0 %2229
      %2231 = vrot.lane.b32.xlu0 %v674, 56
      %v2232 = vpop.permute.xlu0 %2231
      %2233 = vrot.lane.b32.xlu0 %v675, 56
      %v2234 = vpop.permute.xlu0 %2233
      %2235 = vrot.lane.b32.xlu0 %v676, 56
      %v2236 = vpop.permute.xlu0 %2235
      %2237 = vrot.lane.b32.xlu0 %v677, 56
      %v2238 = vpop.permute.xlu0 %2237
      %2239 = vrot.lane.b32.xlu0 %v678, 56
      %v2240 = vpop.permute.xlu0 %2239
      %2241 = vrot.lane.b32.xlu0 %v679, 56
      %v2242 = vpop.permute.xlu0 %2241
      %2243 = vrot.lane.b32.xlu0 %v680, 56
      %v2244 = vpop.permute.xlu0 %2243
      %2245 = vrot.lane.b32.xlu0 %v681, 56
      %v2246 = vpop.permute.xlu0 %2245
      %2247 = vrot.lane.b32.xlu0 %v682, 56
      %v2248 = vpop.permute.xlu0 %2247
      %2249 = vrot.lane.b32.xlu0 %v683, 56
      %v2250 = vpop.permute.xlu0 %2249
      %2251 = vrot.lane.b32.xlu0 %v684, 56
      %v2252 = vpop.permute.xlu0 %2251
      %2253 = vrot.lane.b32.xlu0 %v685, 56
      %v2254 = vpop.permute.xlu0 %2253
      %2255 = vrot.lane.b32.xlu0 %v686, 56
      %v2256 = vpop.permute.xlu0 %2255
      %2257 = vrot.lane.b32.xlu0 %v687, 56
      %v2258 = vpop.permute.xlu0 %2257
      %2259 = vrot.lane.b32.xlu0 %v688, 56
      %v2260 = vpop.permute.xlu0 %2259
      %2261 = vrot.lane.b32.xlu0 %v689, 56
      %v2262 = vpop.permute.xlu0 %2261
      %2263 = vrot.lane.b32.xlu0 %v690, 56
      %v2264 = vpop.permute.xlu0 %2263
      %2265 = vrot.lane.b32.xlu0 %v718, 56
      %v2266 = vpop.permute.xlu0 %2265
      %2267 = vrot.lane.b32.xlu0 %v719, 56
      %v2268 = vpop.permute.xlu0 %2267
      %2303 = vrot.lane.b32.xlu0 %v261, 60
      %v2304 = vpop.permute.xlu0 %2303
      %2305 = vrot.lane.b32.xlu0 %v262, 60
      %v2306 = vpop.permute.xlu0 %2305
      %2307 = vrot.lane.b32.xlu0 %v263, 60
      %v2308 = vpop.permute.xlu0 %2307
      %2309 = vrot.lane.b32.xlu0 %v264, 60
      %v2310 = vpop.permute.xlu0 %2309
      %2311 = vrot.lane.b32.xlu0 %v265, 60
      %v2312 = vpop.permute.xlu0 %2311
      %2313 = vrot.lane.b32.xlu0 %v266, 60
      %v2314 = vpop.permute.xlu0 %2313
      %2315 = vrot.lane.b32.xlu0 %v267, 60
      %v2316 = vpop.permute.xlu0 %2315
      %2317 = vrot.lane.b32.xlu0 %v268, 60
      %v2318 = vpop.permute.xlu0 %2317
      %2319 = vrot.lane.b32.xlu0 %v269, 60
      %v2320 = vpop.permute.xlu0 %2319
      %2321 = vrot.lane.b32.xlu0 %v270, 60
      %v2322 = vpop.permute.xlu0 %2321
      %2323 = vrot.lane.b32.xlu0 %v271, 60
      %v2324 = vpop.permute.xlu0 %2323
      %2325 = vrot.lane.b32.xlu0 %v272, 60
      %v2326 = vpop.permute.xlu0 %2325
      %2327 = vrot.lane.b32.xlu0 %v273, 60
      %v2328 = vpop.permute.xlu0 %2327
      %2329 = vrot.lane.b32.xlu0 %v274, 60
      %v2330 = vpop.permute.xlu0 %2329
      %2331 = vrot.lane.b32.xlu0 %v275, 60
      %v2332 = vpop.permute.xlu0 %2331
      %2333 = vrot.lane.b32.xlu0 %v276, 60
      %v2334 = vpop.permute.xlu0 %2333
      %2335 = vrot.lane.b32.xlu0 %v277, 60
      %v2336 = vpop.permute.xlu0 %2335
      %2337 = vrot.lane.b32.xlu0 %v278, 60
      %v2338 = vpop.permute.xlu0 %2337
      %2339 = vrot.lane.b32.xlu0 %v279, 60
      %v2340 = vpop.permute.xlu0 %2339
      %2341 = vrot.lane.b32.xlu0 %v280, 60
      %v2342 = vpop.permute.xlu0 %2341
      %2343 = vrot.lane.b32.xlu0 %v281, 60
      %v2344 = vpop.permute.xlu0 %2343
      %2345 = vrot.lane.b32.xlu0 %v282, 60
      %v2346 = vpop.permute.xlu0 %2345
      %2347 = vrot.lane.b32.xlu0 %v283, 60
      %v2348 = vpop.permute.xlu0 %2347
      %2349 = vrot.lane.b32.xlu0 %v284, 60
      %v2350 = vpop.permute.xlu0 %2349
      %2351 = vrot.lane.b32.xlu0 %v285, 60
      %v2352 = vpop.permute.xlu0 %2351
      %2353 = vrot.lane.b32.xlu0 %v286, 60
      %v2354 = vpop.permute.xlu0 %2353
      %2355 = vrot.lane.b32.xlu0 %v287, 60
      %v2356 = vpop.permute.xlu0 %2355
      %2357 = vrot.lane.b32.xlu0 %v288, 60
      %v2358 = vpop.permute.xlu0 %2357
      %2359 = vrot.lane.b32.xlu0 %v693, 60
      %v2360 = vpop.permute.xlu0 %2359
      %2361 = vrot.lane.b32.xlu0 %v694, 60
      %v2362 = vpop.permute.xlu0 %2361
      %2363 = vrot.lane.b32.xlu0 %v722, 60
      %v2364 = vpop.permute.xlu0 %2363
      %2365 = vrot.lane.b32.xlu0 %v723, 60
      %v2366 = vpop.permute.xlu0 %2365
      %vm2399 = vcmask 31744
      %v2400 = vsel %vm2399, %v225, %v782
      %v2401 = vsel %vm2399, %v226, %v784
      %v2402 = vsel %vm2399, %v227, %v786
      %v2403 = vsel %vm2399, %v228, %v788
      %v2404 = vsel %vm2399, %v229, %v790
      %v2405 = vsel %vm2399, %v230, %v792
      %v2406 = vsel %vm2399, %v231, %v794
      %v2407 = vsel %vm2399, %v232, %v796
      %v2408 = vsel %vm2399, %v233, %v798
      %v2409 = vsel %vm2399, %v234, %v800
      %v2410 = vsel %vm2399, %v235, %v802
      %v2411 = vsel %vm2399, %v236, %v804
      %v2412 = vsel %vm2399, %v237, %v806
      %v2413 = vsel %vm2399, %v238, %v808
      %v2414 = vsel %vm2399, %v239, %v810
      %v2415 = vsel %vm2399, %v240, %v812
      %v2416 = vsel %vm2399, %v241, %v814
      %v2417 = vsel %vm2399, %v242, %v816
      %v2418 = vsel %vm2399, %v243, %v818
      %v2419 = vsel %vm2399, %v244, %v820
      %v2420 = vsel %vm2399, %v245, %v822
      %v2421 = vsel %vm2399, %v246, %v824
      %v2422 = vsel %vm2399, %v247, %v826
      %v2423 = vsel %vm2399, %v248, %v828
      %v2424 = vsel %vm2399, %v249, %v830
      %v2425 = vsel %vm2399, %v250, %v832
      %v2426 = vsel %vm2399, %v251, %v834
      %v2427 = vsel %vm2399, %v252, %v836
      %v2428 = vsel %vm2399, %v253, %v838
      %v2429 = vsel %vm2399, %v254, %v840
      %v2430 = vsel %vm2399, %v255, %v842
      %v2431 = vsel %vm2399, %v256, %v844
      %vm2432 = vcmask 64512
      %v2433 = vsel %vm2432, %v2400, %v910
      %v2434 = vsel %vm2432, %v2401, %v912
      %v2435 = vsel %vm2432, %v2402, %v914
      %v2436 = vsel %vm2432, %v2403, %v916
      %v2437 = vsel %vm2432, %v2404, %v918
      %v2438 = vsel %vm2432, %v2405, %v920
      %v2439 = vsel %vm2432, %v2406, %v922
      %v2440 = vsel %vm2432, %v2407, %v924
      %v2441 = vsel %vm2432, %v2408, %v926
      %v2442 = vsel %vm2432, %v2409, %v928
      %v2443 = vsel %vm2432, %v2410, %v930
      %v2444 = vsel %vm2432, %v2411, %v932
      %v2445 = vsel %vm2432, %v2412, %v934
      %v2446 = vsel %vm2432, %v2413, %v936
      %v2447 = vsel %vm2432, %v2414, %v938
      %v2448 = vsel %vm2432, %v2415, %v940
      %v2449 = vsel %vm2432, %v2416, %v942
      %v2450 = vsel %vm2432, %v2417, %v944
      %v2451 = vsel %vm2432, %v2418, %v946
      %v2452 = vsel %vm2432, %v2419, %v948
      %v2453 = vsel %vm2432, %v2420, %v950
      %v2454 = vsel %vm2432, %v2421, %v952
      %v2455 = vsel %vm2432, %v2422, %v954
      %v2456 = vsel %vm2432, %v2423, %v956
      %v2457 = vsel %vm2432, %v2424, %v958
      %v2458 = vsel %vm2432, %v2425, %v960
      %v2459 = vsel %vm2432, %v2426, %v962
      %v2460 = vsel %vm2432, %v2427, %v964
      %v2461 = vsel %vm2432, %v2428, %v966
      %v2462 = vsel %vm2432, %v2429, %v968
      %v2463 = vsel %vm2432, %v2430, %v970
      %v2464 = vsel %vm2432, %v2431, %v972
      %vm2465 = vcmask 97280
      %v2466 = vsel %vm2465, %v2433, %v1038
      %v2467 = vsel %vm2465, %v2434, %v1040
      %v2468 = vsel %vm2465, %v2435, %v1042
      %v2469 = vsel %vm2465, %v2436, %v1044
      %v2470 = vsel %vm2465, %v2437, %v1046
      %v2471 = vsel %vm2465, %v2438, %v1048
      %v2472 = vsel %vm2465, %v2439, %v1050
      %v2473 = vsel %vm2465, %v2440, %v1052
      %v2474 = vsel %vm2465, %v2441, %v1054
      %v2475 = vsel %vm2465, %v2442, %v1056
      %v2476 = vsel %vm2465, %v2443, %v1058
      %v2477 = vsel %vm2465, %v2444, %v1060
      %v2478 = vsel %vm2465, %v2445, %v1062
      %v2479 = vsel %vm2465, %v2446, %v1064
      %v2480 = vsel %vm2465, %v2447, %v1066
      %v2481 = vsel %vm2465, %v2448, %v1068
      %v2482 = vsel %vm2465, %v2449, %v1070
      %v2483 = vsel %vm2465, %v2450, %v1072
      %v2484 = vsel %vm2465, %v2451, %v1074
      %v2485 = vsel %vm2465, %v2452, %v1076
      %v2486 = vsel %vm2465, %v2453, %v1078
      %v2487 = vsel %vm2465, %v2454, %v1080
      %v2488 = vsel %vm2465, %v2455, %v1082
      %v2489 = vsel %vm2465, %v2456, %v1084
      %v2490 = vsel %vm2465, %v2457, %v1086
      %v2491 = vsel %vm2465, %v2458, %v1088
      %v2492 = vsel %vm2465, %v2459, %v1090
      %v2493 = vsel %vm2465, %v2460, %v1092
      %v2494 = vsel %vm2465, %v2461, %v1094
      %v2495 = vsel %vm2465, %v2462, %v1096
      %v2496 = vsel %vm2465, %v2463, %v1098
      %v2497 = vsel %vm2465, %v2464, %v1100
      %vm2498 = vcmask 130048
      %v2499 = vsel %vm2498, %v2466, %v1136
      %v2500 = vsel %vm2498, %v2467, %v1138
      %v2501 = vsel %vm2498, %v2468, %v1140
      %v2502 = vsel %vm2498, %v2469, %v1142
      %v2503 = vsel %vm2498, %v2470, %v1144
      %v2504 = vsel %vm2498, %v2471, %v1146
      %v2505 = vsel %vm2498, %v2472, %v1148
      %v2506 = vsel %vm2498, %v2473, %v1150
      %v2507 = vsel %vm2498, %v2474, %v1152
      %v2508 = vsel %vm2498, %v2475, %v1154
      %v2509 = vsel %vm2498, %v2476, %v1156
      %v2510 = vsel %vm2498, %v2477, %v1158
      %v2511 = vsel %vm2498, %v2478, %v1160
      %v2512 = vsel %vm2498, %v2479, %v1162
      %v2513 = vsel %vm2498, %v2480, %v1164
      %v2514 = vsel %vm2498, %v2481, %v1166
      %v2515 = vsel %vm2498, %v2482, %v1168
      %v2516 = vsel %vm2498, %v2483, %v1170
      %v2517 = vsel %vm2498, %v2484, %v1172
      %v2518 = vsel %vm2498, %v2485, %v1174
      %v2519 = vsel %vm2498, %v2486, %v1176
      %v2520 = vsel %vm2498, %v2487, %v1178
      %v2521 = vsel %vm2498, %v2488, %v1180
      %v2522 = vsel %vm2498, %v2489, %v1182
      %v2523 = vsel %vm2498, %v2490, %v1184
      %v2524 = vsel %vm2498, %v2491, %v1186
      %v2525 = vsel %vm2498, %v2492, %v1188
      %v2526 = vsel %vm2498, %v2493, %v1190
      %v2527 = vsel %vm2498, %v2494, %v1192
      %v2528 = vsel %vm2498, %v2495, %v1194
      %v2529 = vsel %vm2498, %v2496, %v1196
      %v2530 = vsel %vm2498, %v2497, %v1198
      %vm2531 = vcmask 162816
      %v2532 = vsel %vm2531, %v2499, %v1234
      %v2533 = vsel %vm2531, %v2500, %v1236
      %v2534 = vsel %vm2531, %v2501, %v1238
      %v2535 = vsel %vm2531, %v2502, %v1240
      %v2536 = vsel %vm2531, %v2503, %v1242
      %v2537 = vsel %vm2531, %v2504, %v1244
      %v2538 = vsel %vm2531, %v2505, %v1246
      %v2539 = vsel %vm2531, %v2506, %v1248
      %v2540 = vsel %vm2531, %v2507, %v1250
      %v2541 = vsel %vm2531, %v2508, %v1252
      %v2542 = vsel %vm2531, %v2509, %v1254
      %v2543 = vsel %vm2531, %v2510, %v1256
      %v2544 = vsel %vm2531, %v2511, %v1258
      %v2545 = vsel %vm2531, %v2512, %v1260
      %v2546 = vsel %vm2531, %v2513, %v1262
      %v2547 = vsel %vm2531, %v2514, %v1264
      %v2548 = vsel %vm2531, %v2515, %v1266
      %v2549 = vsel %vm2531, %v2516, %v1268
      %v2550 = vsel %vm2531, %v2517, %v1270
      %v2551 = vsel %vm2531, %v2518, %v1272
      %v2552 = vsel %vm2531, %v2519, %v1274
      %v2553 = vsel %vm2531, %v2520, %v1276
      %v2554 = vsel %vm2531, %v2521, %v1278
      %v2555 = vsel %vm2531, %v2522, %v1280
      %v2556 = vsel %vm2531, %v2523, %v1282
      %v2557 = vsel %vm2531, %v2524, %v1284
      %v2558 = vsel %vm2531, %v2525, %v1286
      %v2559 = vsel %vm2531, %v2526, %v1288
      %v2560 = vsel %vm2531, %v2527, %v1290
      %v2561 = vsel %vm2531, %v2528, %v1292
      %v2562 = vsel %vm2531, %v2529, %v1294
      %v2563 = vsel %vm2531, %v2530, %v1296
      %vm2564 = vcmask 195584
      %v2565 = vsel %vm2564, %v2532, %v1332
      %v2566 = vsel %vm2564, %v2533, %v1334
      %v2567 = vsel %vm2564, %v2534, %v1336
      %v2568 = vsel %vm2564, %v2535, %v1338
      %v2569 = vsel %vm2564, %v2536, %v1340
      %v2570 = vsel %vm2564, %v2537, %v1342
      %v2571 = vsel %vm2564, %v2538, %v1344
      %v2572 = vsel %vm2564, %v2539, %v1346
      %v2573 = vsel %vm2564, %v2540, %v1348
      %v2574 = vsel %vm2564, %v2541, %v1350
      %v2575 = vsel %vm2564, %v2542, %v1352
      %v2576 = vsel %vm2564, %v2543, %v1354
      %v2577 = vsel %vm2564, %v2544, %v1356
      %v2578 = vsel %vm2564, %v2545, %v1358
      %v2579 = vsel %vm2564, %v2546, %v1360
      %v2580 = vsel %vm2564, %v2547, %v1362
      %v2581 = vsel %vm2564, %v2548, %v1364
      %v2582 = vsel %vm2564, %v2549, %v1366
      %v2583 = vsel %vm2564, %v2550, %v1368
      %v2584 = vsel %vm2564, %v2551, %v1370
      %v2585 = vsel %vm2564, %v2552, %v1372
      %v2586 = vsel %vm2564, %v2553, %v1374
      %v2587 = vsel %vm2564, %v2554, %v1376
      %v2588 = vsel %vm2564, %v2555, %v1378
      %v2589 = vsel %vm2564, %v2556, %v1380
      %v2590 = vsel %vm2564, %v2557, %v1382
      %v2591 = vsel %vm2564, %v2558, %v1384
      %v2592 = vsel %vm2564, %v2559, %v1386
      %v2593 = vsel %vm2564, %v2560, %v1388
      %v2594 = vsel %vm2564, %v2561, %v1390
      %v2595 = vsel %vm2564, %v2562, %v1392
      %v2596 = vsel %vm2564, %v2563, %v1394
      %vm2597 = vcmask 228352
      %v2598 = vsel %vm2597, %v2565, %v1430
      %v2599 = vsel %vm2597, %v2566, %v1432
      %v2600 = vsel %vm2597, %v2567, %v1434
      %v2601 = vsel %vm2597, %v2568, %v1436
      %v2602 = vsel %vm2597, %v2569, %v1438
      %v2603 = vsel %vm2597, %v2570, %v1440
      %v2604 = vsel %vm2597, %v2571, %v1442
      %v2605 = vsel %vm2597, %v2572, %v1444
      %v2606 = vsel %vm2597, %v2573, %v1446
      %v2607 = vsel %vm2597, %v2574, %v1448
      %v2608 = vsel %vm2597, %v2575, %v1450
      %v2609 = vsel %vm2597, %v2576, %v1452
      %v2610 = vsel %vm2597, %v2577, %v1454
      %v2611 = vsel %vm2597, %v2578, %v1456
      %v2612 = vsel %vm2597, %v2579, %v1458
      %v2613 = vsel %vm2597, %v2580, %v1460
      %v2614 = vsel %vm2597, %v2581, %v1462
      %v2615 = vsel %vm2597, %v2582, %v1464
      %v2616 = vsel %vm2597, %v2583, %v1466
      %v2617 = vsel %vm2597, %v2584, %v1468
      %v2618 = vsel %vm2597, %v2585, %v1470
      %v2619 = vsel %vm2597, %v2586, %v1472
      %v2620 = vsel %vm2597, %v2587, %v1474
      %v2621 = vsel %vm2597, %v2588, %v1476
      %v2622 = vsel %vm2597, %v2589, %v1478
      %v2623 = vsel %vm2597, %v2590, %v1480
      %v2624 = vsel %vm2597, %v2591, %v1482
      %v2625 = vsel %vm2597, %v2592, %v1484
      %v2626 = vsel %vm2597, %v2593, %v1486
      %v2627 = vsel %vm2597, %v2594, %v1488
      %v2628 = vsel %vm2597, %v2595, %v1490
      %v2629 = vsel %vm2597, %v2596, %v1492
      %vm2630 = vcmask 261120
      %v2631 = vsel %vm2630, %v2598, %v1528
      %v2632 = vsel %vm2630, %v2599, %v1530
      %v2633 = vsel %vm2630, %v2600, %v1532
      %v2634 = vsel %vm2630, %v2601, %v1534
      %v2635 = vsel %vm2630, %v2602, %v1536
      %v2636 = vsel %vm2630, %v2603, %v1538
      %v2637 = vsel %vm2630, %v2604, %v1540
      %v2638 = vsel %vm2630, %v2605, %v1542
      %v2639 = vsel %vm2630, %v2606, %v1544
      %v2640 = vsel %vm2630, %v2607, %v1546
      %v2641 = vsel %vm2630, %v2608, %v1548
      %v2642 = vsel %vm2630, %v2609, %v1550
      %v2643 = vsel %vm2630, %v2610, %v1552
      %v2644 = vsel %vm2630, %v2611, %v1554
      %v2645 = vsel %vm2630, %v2612, %v1556
      %v2646 = vsel %vm2630, %v2613, %v1558
      %v2647 = vsel %vm2630, %v2614, %v1560
      %v2648 = vsel %vm2630, %v2615, %v1562
      %v2649 = vsel %vm2630, %v2616, %v1564
      %v2650 = vsel %vm2630, %v2617, %v1566
      %v2651 = vsel %vm2630, %v2618, %v1568
      %v2652 = vsel %vm2630, %v2619, %v1570
      %v2653 = vsel %vm2630, %v2620, %v1572
      %v2654 = vsel %vm2630, %v2621, %v1574
      %v2655 = vsel %vm2630, %v2622, %v1576
      %v2656 = vsel %vm2630, %v2623, %v1578
      %v2657 = vsel %vm2630, %v2624, %v1580
      %v2658 = vsel %vm2630, %v2625, %v1582
      %v2659 = vsel %vm2630, %v2626, %v1584
      %v2660 = vsel %vm2630, %v2627, %v1586
      %v2661 = vsel %vm2630, %v2628, %v1588
      %v2662 = vsel %vm2630, %v2629, %v1590
      %vm2663 = vcmask 293888
      %v2664 = vsel %vm2663, %v2631, %v1656
      %v2665 = vsel %vm2663, %v2632, %v1658
      %v2666 = vsel %vm2663, %v2633, %v1660
      %v2667 = vsel %vm2663, %v2634, %v1662
      %v2668 = vsel %vm2663, %v2635, %v1664
      %v2669 = vsel %vm2663, %v2636, %v1666
      %v2670 = vsel %vm2663, %v2637, %v1668
      %v2671 = vsel %vm2663, %v2638, %v1670
      %v2672 = vsel %vm2663, %v2639, %v1672
      %v2673 = vsel %vm2663, %v2640, %v1674
      %v2674 = vsel %vm2663, %v2641, %v1676
      %v2675 = vsel %vm2663, %v2642, %v1678
      %v2676 = vsel %vm2663, %v2643, %v1680
      %v2677 = vsel %vm2663, %v2644, %v1682
      %v2678 = vsel %vm2663, %v2645, %v1684
      %v2679 = vsel %vm2663, %v2646, %v1686
      %v2680 = vsel %vm2663, %v2647, %v1688
      %v2681 = vsel %vm2663, %v2648, %v1690
      %v2682 = vsel %vm2663, %v2649, %v1692
      %v2683 = vsel %vm2663, %v2650, %v1694
      %v2684 = vsel %vm2663, %v2651, %v1696
      %v2685 = vsel %vm2663, %v2652, %v1698
      %v2686 = vsel %vm2663, %v2653, %v1700
      %v2687 = vsel %vm2663, %v2654, %v1702
      %v2688 = vsel %vm2663, %v2655, %v1704
      %v2689 = vsel %vm2663, %v2656, %v1706
      %v2690 = vsel %vm2663, %v2657, %v1708
      %v2691 = vsel %vm2663, %v2658, %v1710
      %v2692 = vsel %vm2663, %v2659, %v1712
      %v2693 = vsel %vm2663, %v2660, %v1714
      %v2694 = vsel %vm2663, %v2661, %v1716
      %v2695 = vsel %vm2663, %v2662, %v1718
      %vm2696 = vcmask 326656
      %v2697 = vsel %vm2696, %v2664, %v1784
      %v2698 = vsel %vm2696, %v2665, %v1786
      %v2699 = vsel %vm2696, %v2666, %v1788
      %v2700 = vsel %vm2696, %v2667, %v1790
      %v2701 = vsel %vm2696, %v2668, %v1792
      %v2702 = vsel %vm2696, %v2669, %v1794
      %v2703 = vsel %vm2696, %v2670, %v1796
      %v2704 = vsel %vm2696, %v2671, %v1798
      %v2705 = vsel %vm2696, %v2672, %v1800
      %v2706 = vsel %vm2696, %v2673, %v1802
      %v2707 = vsel %vm2696, %v2674, %v1804
      %v2708 = vsel %vm2696, %v2675, %v1806
      %v2709 = vsel %vm2696, %v2676, %v1808
      %v2710 = vsel %vm2696, %v2677, %v1810
      %v2711 = vsel %vm2696, %v2678, %v1812
      %v2712 = vsel %vm2696, %v2679, %v1814
      %v2713 = vsel %vm2696, %v2680, %v1816
      %v2714 = vsel %vm2696, %v2681, %v1818
      %v2715 = vsel %vm2696, %v2682, %v1820
      %v2716 = vsel %vm2696, %v2683, %v1822
      %v2717 = vsel %vm2696, %v2684, %v1824
      %v2718 = vsel %vm2696, %v2685, %v1826
      %v2719 = vsel %vm2696, %v2686, %v1828
      %v2720 = vsel %vm2696, %v2687, %v1830
      %v2721 = vsel %vm2696, %v2688, %v1832
      %v2722 = vsel %vm2696, %v2689, %v1834
      %v2723 = vsel %vm2696, %v2690, %v1836
      %v2724 = vsel %vm2696, %v2691, %v1838
      %v2725 = vsel %vm2696, %v2692, %v1840
      %v2726 = vsel %vm2696, %v2693, %v1842
      %v2727 = vsel %vm2696, %v2694, %v1844
      %v2728 = vsel %vm2696, %v2695, %v1846
      %vm2729 = vcmask 359424
      %v2730 = vsel %vm2729, %v2697, %v1912
      %v2731 = vsel %vm2729, %v2698, %v1914
      %v2732 = vsel %vm2729, %v2699, %v1916
      %v2733 = vsel %vm2729, %v2700, %v1918
      %v2734 = vsel %vm2729, %v2701, %v1920
      %v2735 = vsel %vm2729, %v2702, %v1922
      %v2736 = vsel %vm2729, %v2703, %v1924
      %v2737 = vsel %vm2729, %v2704, %v1926
      %v2738 = vsel %vm2729, %v2705, %v1928
      %v2739 = vsel %vm2729, %v2706, %v1930
      %v2740 = vsel %vm2729, %v2707, %v1932
      %v2741 = vsel %vm2729, %v2708, %v1934
      %v2742 = vsel %vm2729, %v2709, %v1936
      %v2743 = vsel %vm2729, %v2710, %v1938
      %v2744 = vsel %vm2729, %v2711, %v1940
      %v2745 = vsel %vm2729, %v2712, %v1942
      %v2746 = vsel %vm2729, %v2713, %v1944
      %v2747 = vsel %vm2729, %v2714, %v1946
      %v2748 = vsel %vm2729, %v2715, %v1948
      %v2749 = vsel %vm2729, %v2716, %v1950
      %v2750 = vsel %vm2729, %v2717, %v1952
      %v2751 = vsel %vm2729, %v2718, %v1954
      %v2752 = vsel %vm2729, %v2719, %v1956
      %v2753 = vsel %vm2729, %v2720, %v1958
      %v2754 = vsel %vm2729, %v2721, %v1960
      %v2755 = vsel %vm2729, %v2722, %v1962
      %v2756 = vsel %vm2729, %v2723, %v1964
      %v2757 = vsel %vm2729, %v2724, %v1966
      %v2758 = vsel %vm2729, %v2725, %v1968
      %v2759 = vsel %vm2729, %v2726, %v1970
      %v2760 = vsel %vm2729, %v2727, %v1972
      %v2761 = vsel %vm2729, %v2728, %v1974
      %vm2762 = vcmask 392192
      %v2763 = vsel %vm2762, %v2730, %v2010
      %v2764 = vsel %vm2762, %v2731, %v2012
      %v2765 = vsel %vm2762, %v2732, %v2014
      %v2766 = vsel %vm2762, %v2733, %v2016
      %v2767 = vsel %vm2762, %v2734, %v2018
      %v2768 = vsel %vm2762, %v2735, %v2020
      %v2769 = vsel %vm2762, %v2736, %v2022
      %v2770 = vsel %vm2762, %v2737, %v2024
      %v2771 = vsel %vm2762, %v2738, %v2026
      %v2772 = vsel %vm2762, %v2739, %v2028
      %v2773 = vsel %vm2762, %v2740, %v2030
      %v2774 = vsel %vm2762, %v2741, %v2032
      %v2775 = vsel %vm2762, %v2742, %v2034
      %v2776 = vsel %vm2762, %v2743, %v2036
      %v2777 = vsel %vm2762, %v2744, %v2038
      %v2778 = vsel %vm2762, %v2745, %v2040
      %v2779 = vsel %vm2762, %v2746, %v2042
      %v2780 = vsel %vm2762, %v2747, %v2044
      %v2781 = vsel %vm2762, %v2748, %v2046
      %v2782 = vsel %vm2762, %v2749, %v2048
      %v2783 = vsel %vm2762, %v2750, %v2050
      %v2784 = vsel %vm2762, %v2751, %v2052
      %v2785 = vsel %vm2762, %v2752, %v2054
      %v2786 = vsel %vm2762, %v2753, %v2056
      %v2787 = vsel %vm2762, %v2754, %v2058
      %v2788 = vsel %vm2762, %v2755, %v2060
      %v2789 = vsel %vm2762, %v2756, %v2062
      %v2790 = vsel %vm2762, %v2757, %v2064
      %v2791 = vsel %vm2762, %v2758, %v2066
      %v2792 = vsel %vm2762, %v2759, %v2068
      %v2793 = vsel %vm2762, %v2760, %v2070
      %v2794 = vsel %vm2762, %v2761, %v2072
      %vm2795 = vcmask 424960
      %v2796 = vsel %vm2795, %v2763, %v2108
      %v2797 = vsel %vm2795, %v2764, %v2110
      %v2798 = vsel %vm2795, %v2765, %v2112
      %v2799 = vsel %vm2795, %v2766, %v2114
      %v2800 = vsel %vm2795, %v2767, %v2116
      %v2801 = vsel %vm2795, %v2768, %v2118
      %v2802 = vsel %vm2795, %v2769, %v2120
      %v2803 = vsel %vm2795, %v2770, %v2122
      %v2804 = vsel %vm2795, %v2771, %v2124
      %v2805 = vsel %vm2795, %v2772, %v2126
      %v2806 = vsel %vm2795, %v2773, %v2128
      %v2807 = vsel %vm2795, %v2774, %v2130
      %v2808 = vsel %vm2795, %v2775, %v2132
      %v2809 = vsel %vm2795, %v2776, %v2134
      %v2810 = vsel %vm2795, %v2777, %v2136
      %v2811 = vsel %vm2795, %v2778, %v2138
      %v2812 = vsel %vm2795, %v2779, %v2140
      %v2813 = vsel %vm2795, %v2780, %v2142
      %v2814 = vsel %vm2795, %v2781, %v2144
      %v2815 = vsel %vm2795, %v2782, %v2146
      %v2816 = vsel %vm2795, %v2783, %v2148
      %v2817 = vsel %vm2795, %v2784, %v2150
      %v2818 = vsel %vm2795, %v2785, %v2152
      %v2819 = vsel %vm2795, %v2786, %v2154
      %v2820 = vsel %vm2795, %v2787, %v2156
      %v2821 = vsel %vm2795, %v2788, %v2158
      %v2822 = vsel %vm2795, %v2789, %v2160
      %v2823 = vsel %vm2795, %v2790, %v2162
      %v2824 = vsel %vm2795, %v2791, %v2164
      %v2825 = vsel %vm2795, %v2792, %v2166
      %v2826 = vsel %vm2795, %v2793, %v2168
      %v2827 = vsel %vm2795, %v2794, %v2170
      %vm2828 = vcmask 457728
      %v2829 = vsel %vm2828, %v2796, %v2206
      %v2830 = vsel %vm2828, %v2797, %v2208
      %v2831 = vsel %vm2828, %v2798, %v2210
      %v2832 = vsel %vm2828, %v2799, %v2212
      %v2833 = vsel %vm2828, %v2800, %v2214
      %v2834 = vsel %vm2828, %v2801, %v2216
      %v2835 = vsel %vm2828, %v2802, %v2218
      %v2836 = vsel %vm2828, %v2803, %v2220
      %v2837 = vsel %vm2828, %v2804, %v2222
      %v2838 = vsel %vm2828, %v2805, %v2224
      %v2839 = vsel %vm2828, %v2806, %v2226
      %v2840 = vsel %vm2828, %v2807, %v2228
      %v2841 = vsel %vm2828, %v2808, %v2230
      %v2842 = vsel %vm2828, %v2809, %v2232
      %v2843 = vsel %vm2828, %v2810, %v2234
      %v2844 = vsel %vm2828, %v2811, %v2236
      %v2845 = vsel %vm2828, %v2812, %v2238
      %v2846 = vsel %vm2828, %v2813, %v2240
      %v2847 = vsel %vm2828, %v2814, %v2242
      %v2848 = vsel %vm2828, %v2815, %v2244
      %v2849 = vsel %vm2828, %v2816, %v2246
      %v2850 = vsel %vm2828, %v2817, %v2248
      %v2851 = vsel %vm2828, %v2818, %v2250
      %v2852 = vsel %vm2828, %v2819, %v2252
      %v2853 = vsel %vm2828, %v2820, %v2254
      %v2854 = vsel %vm2828, %v2821, %v2256
      %v2855 = vsel %vm2828, %v2822, %v2258
      %v2856 = vsel %vm2828, %v2823, %v2260
      %v2857 = vsel %vm2828, %v2824, %v2262
      %v2858 = vsel %vm2828, %v2825, %v2264
      %v2859 = vsel %vm2828, %v2826, %v2266
      %v2860 = vsel %vm2828, %v2827, %v2268
      %vm2861 = vcmask 490496
      %v2862 = vsel %vm2861, %v2829, %v2304
      %v2863 = vsel %vm2861, %v2830, %v2306
      %v2864 = vsel %vm2861, %v2831, %v2308
      %v2865 = vsel %vm2861, %v2832, %v2310
      %v2866 = vsel %vm2861, %v2833, %v2312
      %v2867 = vsel %vm2861, %v2834, %v2314
      %v2868 = vsel %vm2861, %v2835, %v2316
      %v2869 = vsel %vm2861, %v2836, %v2318
      %v2870 = vsel %vm2861, %v2837, %v2320
      %v2871 = vsel %vm2861, %v2838, %v2322
      %v2872 = vsel %vm2861, %v2839, %v2324
      %v2873 = vsel %vm2861, %v2840, %v2326
      %v2874 = vsel %vm2861, %v2841, %v2328
      %v2875 = vsel %vm2861, %v2842, %v2330
      %v2876 = vsel %vm2861, %v2843, %v2332
      %v2877 = vsel %vm2861, %v2844, %v2334
      %v2878 = vsel %vm2861, %v2845, %v2336
      %v2879 = vsel %vm2861, %v2846, %v2338
      %v2880 = vsel %vm2861, %v2847, %v2340
      %v2881 = vsel %vm2861, %v2848, %v2342
      %v2882 = vsel %vm2861, %v2849, %v2344
      %v2883 = vsel %vm2861, %v2850, %v2346
      %v2884 = vsel %vm2861, %v2851, %v2348
      %v2885 = vsel %vm2861, %v2852, %v2350
      %v2886 = vsel %vm2861, %v2853, %v2352
      %v2887 = vsel %vm2861, %v2854, %v2354
      %v2888 = vsel %vm2861, %v2855, %v2356
      %v2889 = vsel %vm2861, %v2856, %v2358
      %v2890 = vsel %vm2861, %v2857, %v2360
      %v2891 = vsel %vm2861, %v2858, %v2362
      %v2892 = vsel %vm2861, %v2859, %v2364
      %v2893 = vsel %vm2861, %v2860, %v2366
      %2896 = vrot.lane.b32.xlu0 %v663, 4
      %v2897 = vpop.permute.xlu0 %2896
      %2898 = vrot.lane.b32.xlu0 %v664, 4
      %v2899 = vpop.permute.xlu0 %2898
      %2900 = vrot.lane.b32.xlu0 %v665, 4
      %v2901 = vpop.permute.xlu0 %2900
      %2902 = vrot.lane.b32.xlu0 %v666, 4
      %v2903 = vpop.permute.xlu0 %2902
      %2904 = vrot.lane.b32.xlu0 %v667, 4
      %v2905 = vpop.permute.xlu0 %2904
      %2906 = vrot.lane.b32.xlu0 %v668, 4
      %v2907 = vpop.permute.xlu0 %2906
      %2908 = vrot.lane.b32.xlu0 %v669, 4
      %v2909 = vpop.permute.xlu0 %2908
      %2910 = vrot.lane.b32.xlu0 %v670, 4
      %v2911 = vpop.permute.xlu0 %2910
      %2912 = vrot.lane.b32.xlu0 %v671, 4
      %v2913 = vpop.permute.xlu0 %2912
      %2914 = vrot.lane.b32.xlu0 %v672, 4
      %v2915 = vpop.permute.xlu0 %2914
      %2916 = vrot.lane.b32.xlu0 %v673, 4
      %v2917 = vpop.permute.xlu0 %2916
      %2918 = vrot.lane.b32.xlu0 %v674, 4
      %v2919 = vpop.permute.xlu0 %2918
      %2920 = vrot.lane.b32.xlu0 %v675, 4
      %v2921 = vpop.permute.xlu0 %2920
      %2922 = vrot.lane.b32.xlu0 %v676, 4
      %v2923 = vpop.permute.xlu0 %2922
      %2924 = vrot.lane.b32.xlu0 %v677, 4
      %v2925 = vpop.permute.xlu0 %2924
      %2926 = vrot.lane.b32.xlu0 %v678, 4
      %v2927 = vpop.permute.xlu0 %2926
      %2928 = vrot.lane.b32.xlu0 %v679, 4
      %v2929 = vpop.permute.xlu0 %2928
      %2930 = vrot.lane.b32.xlu0 %v680, 4
      %v2931 = vpop.permute.xlu0 %2930
      %2932 = vrot.lane.b32.xlu0 %v681, 4
      %v2933 = vpop.permute.xlu0 %2932
      %2934 = vrot.lane.b32.xlu0 %v682, 4
      %v2935 = vpop.permute.xlu0 %2934
      %2936 = vrot.lane.b32.xlu0 %v683, 4
      %v2937 = vpop.permute.xlu0 %2936
      %2938 = vrot.lane.b32.xlu0 %v684, 4
      %v2939 = vpop.permute.xlu0 %2938
      %2940 = vrot.lane.b32.xlu0 %v685, 4
      %v2941 = vpop.permute.xlu0 %2940
      %2942 = vrot.lane.b32.xlu0 %v686, 4
      %v2943 = vpop.permute.xlu0 %2942
      %2944 = vrot.lane.b32.xlu0 %v687, 4
      %v2945 = vpop.permute.xlu0 %2944
      %2946 = vrot.lane.b32.xlu0 %v688, 4
      %v2947 = vpop.permute.xlu0 %2946
      %2948 = vrot.lane.b32.xlu0 %v689, 4
      %v2949 = vpop.permute.xlu0 %2948
      %2950 = vrot.lane.b32.xlu0 %v690, 4
      %v2951 = vpop.permute.xlu0 %2950
      %2952 = vrot.lane.b32.xlu0 %v718, 4
      %v2953 = vpop.permute.xlu0 %2952
      %2954 = vrot.lane.b32.xlu0 %v719, 4
      %v2955 = vpop.permute.xlu0 %2954
      %2956 = vrot.lane.b32.xlu0 %v747, 4
      %v2957 = vpop.permute.xlu0 %2956
      %2958 = vrot.lane.b32.xlu0 %v748, 4
      %v2959 = vpop.permute.xlu0 %2958
      %v2992 = vsel %vm2399, %v486, %v2897
      %v2993 = vsel %vm2399, %v487, %v2899
      %v2994 = vsel %vm2399, %v488, %v2901
      %v2995 = vsel %vm2399, %v489, %v2903
      %v2996 = vsel %vm2399, %v490, %v2905
      %v2997 = vsel %vm2399, %v491, %v2907
      %v2998 = vsel %vm2399, %v492, %v2909
      %v2999 = vsel %vm2399, %v493, %v2911
      %v3000 = vsel %vm2399, %v494, %v2913
      %v3001 = vsel %vm2399, %v495, %v2915
      %v3002 = vsel %vm2399, %v496, %v2917
      %v3003 = vsel %vm2399, %v497, %v2919
      %v3004 = vsel %vm2399, %v498, %v2921
      %v3005 = vsel %vm2399, %v499, %v2923
      %v3006 = vsel %vm2399, %v500, %v2925
      %v3007 = vsel %vm2399, %v501, %v2927
      %v3008 = vsel %vm2399, %v502, %v2929
      %v3009 = vsel %vm2399, %v503, %v2931
      %v3010 = vsel %vm2399, %v504, %v2933
      %v3011 = vsel %vm2399, %v505, %v2935
      %v3012 = vsel %vm2399, %v506, %v2937
      %v3013 = vsel %vm2399, %v507, %v2939
      %v3014 = vsel %vm2399, %v508, %v2941
      %v3015 = vsel %vm2399, %v509, %v2943
      %v3016 = vsel %vm2399, %v510, %v2945
      %v3017 = vsel %vm2399, %v511, %v2947
      %v3018 = vsel %vm2399, %v512, %v2949
      %v3019 = vsel %vm2399, %v513, %v2951
      %v3020 = vsel %vm2399, %v707, %v2953
      %v3021 = vsel %vm2399, %v708, %v2955
      %v3022 = vsel %vm2399, %v736, %v2957
      %v3023 = vsel %vm2399, %v737, %v2959
      %3056 = vrot.lane.b32.xlu0 %v2992, 64
      %v3057 = vpop.permute.xlu0 %3056
      %3058 = vrot.lane.b32.xlu0 %v2993, 64
      %v3059 = vpop.permute.xlu0 %3058
      %3060 = vrot.lane.b32.xlu0 %v2994, 64
      %v3061 = vpop.permute.xlu0 %3060
      %3062 = vrot.lane.b32.xlu0 %v2995, 64
      %v3063 = vpop.permute.xlu0 %3062
      %3064 = vrot.lane.b32.xlu0 %v2996, 64
      %v3065 = vpop.permute.xlu0 %3064
      %3066 = vrot.lane.b32.xlu0 %v2997, 64
      %v3067 = vpop.permute.xlu0 %3066
      %3068 = vrot.lane.b32.xlu0 %v2998, 64
      %v3069 = vpop.permute.xlu0 %3068
      %3070 = vrot.lane.b32.xlu0 %v2999, 64
      %v3071 = vpop.permute.xlu0 %3070
      %3072 = vrot.lane.b32.xlu0 %v3000, 64
      %v3073 = vpop.permute.xlu0 %3072
      %3074 = vrot.lane.b32.xlu0 %v3001, 64
      %v3075 = vpop.permute.xlu0 %3074
      %3076 = vrot.lane.b32.xlu0 %v3002, 64
      %v3077 = vpop.permute.xlu0 %3076
      %3078 = vrot.lane.b32.xlu0 %v3003, 64
      %v3079 = vpop.permute.xlu0 %3078
      %3080 = vrot.lane.b32.xlu0 %v3004, 64
      %v3081 = vpop.permute.xlu0 %3080
      %3082 = vrot.lane.b32.xlu0 %v3005, 64
      %v3083 = vpop.permute.xlu0 %3082
      %3084 = vrot.lane.b32.xlu0 %v3006, 64
      %v3085 = vpop.permute.xlu0 %3084
      %3086 = vrot.lane.b32.xlu0 %v3007, 64
      %v3087 = vpop.permute.xlu0 %3086
      %3088 = vrot.lane.b32.xlu0 %v3008, 64
      %v3089 = vpop.permute.xlu0 %3088
      %3090 = vrot.lane.b32.xlu0 %v3009, 64
      %v3091 = vpop.permute.xlu0 %3090
      %3092 = vrot.lane.b32.xlu0 %v3010, 64
      %v3093 = vpop.permute.xlu0 %3092
      %3094 = vrot.lane.b32.xlu0 %v3011, 64
      %v3095 = vpop.permute.xlu0 %3094
      %3096 = vrot.lane.b32.xlu0 %v3012, 64
      %v3097 = vpop.permute.xlu0 %3096
      %3098 = vrot.lane.b32.xlu0 %v3013, 64
      %v3099 = vpop.permute.xlu0 %3098
      %3100 = vrot.lane.b32.xlu0 %v3014, 64
      %v3101 = vpop.permute.xlu0 %3100
      %3102 = vrot.lane.b32.xlu0 %v3015, 64
      %v3103 = vpop.permute.xlu0 %3102
      %3104 = vrot.lane.b32.xlu0 %v3016, 64
      %v3105 = vpop.permute.xlu0 %3104
      %3106 = vrot.lane.b32.xlu0 %v3017, 64
      %v3107 = vpop.permute.xlu0 %3106
      %3108 = vrot.lane.b32.xlu0 %v3018, 64
      %v3109 = vpop.permute.xlu0 %3108
      %3110 = vrot.lane.b32.xlu0 %v3019, 64
      %v3111 = vpop.permute.xlu0 %3110
      %3112 = vrot.lane.b32.xlu0 %v3020, 64
      %v3113 = vpop.permute.xlu0 %3112
      %3114 = vrot.lane.b32.xlu0 %v3021, 64
      %v3115 = vpop.permute.xlu0 %3114
      %3116 = vrot.lane.b32.xlu0 %v3022, 64
      %v3117 = vpop.permute.xlu0 %3116
      %3118 = vrot.lane.b32.xlu0 %v3023, 64
      %v3119 = vpop.permute.xlu0 %3118
      %vm3152 = vcmask 523264
      %v3153 = vsel %vm3152, %v2862, %v3057
      %v3154 = vsel %vm3152, %v2863, %v3059
      %v3155 = vsel %vm3152, %v2864, %v3061
      %v3156 = vsel %vm3152, %v2865, %v3063
      %v3157 = vsel %vm3152, %v2866, %v3065
      %v3158 = vsel %vm3152, %v2867, %v3067
      %v3159 = vsel %vm3152, %v2868, %v3069
      %v3160 = vsel %vm3152, %v2869, %v3071
      %v3161 = vsel %vm3152, %v2870, %v3073
      %v3162 = vsel %vm3152, %v2871, %v3075
      %v3163 = vsel %vm3152, %v2872, %v3077
      %v3164 = vsel %vm3152, %v2873, %v3079
      %v3165 = vsel %vm3152, %v2874, %v3081
      %v3166 = vsel %vm3152, %v2875, %v3083
      %v3167 = vsel %vm3152, %v2876, %v3085
      %v3168 = vsel %vm3152, %v2877, %v3087
      %v3169 = vsel %vm3152, %v2878, %v3089
      %v3170 = vsel %vm3152, %v2879, %v3091
      %v3171 = vsel %vm3152, %v2880, %v3093
      %v3172 = vsel %vm3152, %v2881, %v3095
      %v3173 = vsel %vm3152, %v2882, %v3097
      %v3174 = vsel %vm3152, %v2883, %v3099
      %v3175 = vsel %vm3152, %v2884, %v3101
      %v3176 = vsel %vm3152, %v2885, %v3103
      %v3177 = vsel %vm3152, %v2886, %v3105
      %v3178 = vsel %vm3152, %v2887, %v3107
      %v3179 = vsel %vm3152, %v2888, %v3109
      %v3180 = vsel %vm3152, %v2889, %v3111
      %v3181 = vsel %vm3152, %v2890, %v3113
      %v3182 = vsel %vm3152, %v2891, %v3115
      %v3183 = vsel %vm3152, %v2892, %v3117
      %v3184 = vsel %vm3152, %v2893, %v3119
      %v3185 = vld [vmem:[%s1] sm:$0xff]
      %v3186 = vld [vmem:[%s1 + $0x8] sm:$0xff]
      %v3187 = vld [vmem:[%s1 + $0x10] sm:$0xff]
      %v3188 = vld [vmem:[%s1 + $0x18] sm:$0xff]
      %v3189 = vld [vmem:[%s1 + $0x20] sm:$0xf]
      %v3190 = vmax.f32 %v3185, 0.0
      %v3191 = vmax.f32 %v3186, 0.0
      %v3192 = vmax.f32 %v3187, 0.0
      %v3193 = vmax.f32 %v3188, 0.0
      %v3194 = vmax.f32 %v3189, 0.0
      %v3195 = vmin.f32 %v3185, 0.0
      %v3196 = vmin.f32 %v3186, 0.0
      %v3197 = vmin.f32 %v3187, 0.0
      %v3198 = vmin.f32 %v3188, 0.0
      %v3199 = vmin.f32 %v3189, 0.0
      %vm3205 = vcmask 1043456
      %v3206 = vrot.slane %v3195, 4
      %v3207 = vrot.slane %v3196, 4
      %v3208 = vsel %vm3205, %v3206, %v3207
      %v3209 = vrot.slane %v3197, 4
      %v3210 = vsel %vm3205, %v3207, %v3209
      %v3211 = vrot.slane %v3198, 4
      %v3212 = vsel %vm3205, %v3209, %v3211
      %v3213 = vrot.slane %v3199, 4
      %v3214 = vsel %vm3205, %v3211, %v3213
      %v3220 = vsel %vm3205, %v3194, %v3206
      %v3221 = vld [vmem:[%s2] sm:$0x1]
      %v3223 = vlaneseq
      %v3224 = vshrl.u32 %v3223, 7
      %v3225 = vsub.s32 0, %v3224
      %v3226 = vrot.slane %v3221, %v3225
      %vm3228 = vcmask 588800
      %v3230 = vsel %vm3228, %v3153, 0
      %v3233 = vsel %vm3228, %v3154, 0
      %v3236 = vsel %vm3228, %v3155, 0
      %v3239 = vsel %vm3228, %v3156, 0
      %v3242 = vsel %vm3228, %v3157, 0
      %v3245 = vsel %vm3228, %v3158, 0
      %v3248 = vsel %vm3228, %v3159, 0
      %v3251 = vsel %vm3228, %v3160, 0
      %v3254 = vsel %vm3228, %v3161, 0
      %v3257 = vsel %vm3228, %v3162, 0
      %v3260 = vsel %vm3228, %v3163, 0
      %v3263 = vsel %vm3228, %v3164, 0
      %v3266 = vsel %vm3228, %v3165, 0
      %v3269 = vsel %vm3228, %v3166, 0
      %v3272 = vsel %vm3228, %v3167, 0
      %v3275 = vsel %vm3228, %v3168, 0
      %v3278 = vsel %vm3228, %v3169, 0
      %v3281 = vsel %vm3228, %v3170, 0
      %v3284 = vsel %vm3228, %v3171, 0
      %v3287 = vsel %vm3228, %v3172, 0
      %v3290 = vsel %vm3228, %v3173, 0
      %v3293 = vsel %vm3228, %v3174, 0
      %v3296 = vsel %vm3228, %v3175, 0
      %v3299 = vsel %vm3228, %v3176, 0
      %v3302 = vsel %vm3228, %v3177, 0
      %v3305 = vsel %vm3228, %v3178, 0
      %v3308 = vsel %vm3228, %v3179, 0
      %v3311 = vsel %vm3228, %v3180, 0
      %v3314 = vsel %vm3228, %v3181, 0
      %v3317 = vsel %vm3228, %v3182, 0
      %v3320 = vsel %vm3228, %v3183, 0
      %v3323 = vsel %vm3228, %v3184, 0
      %3325 = vmatprep.subr.mxu0 0.0
      %3326 = vmatpush1.msra.mxu0 %v3190
      %3327 = vmatprep.subr.mxu0 0.0
      %3328 = vmatpush1.msra.mxu0 %v3191
      %3329 = vmatprep.subr.mxu0 0.0
      %3330 = vmatpush1.msra.mxu0 %v3192
      %3331 = vmatprep.subr.mxu0 0.0
      %3332 = vmatpush1.msra.mxu0 %v3193
      %3333 = vmatprep.subr.mxu0 0.0
      %3334 = vmatpush1.msra.mxu0 %v3220
      %3335 = vmatprep.subr.mxu0 0.0
      %3336 = vmatpush1.msra.mxu0 %v3208
      %3337 = vmatprep.subr.mxu0 0.0
      %3338 = vmatpush1.msra.mxu0 %v3210
      %3339 = vmatprep.subr.mxu0 0.0
      %3340 = vmatpush1.msra.mxu0 %v3212
      %3341 = vmatprep.subr.mxu0 0.0
      %3342 = vmatpush1.msra.mxu0 %v3214
      %3343 = vmatprep.subr.mxu0 0.0
      %3344 = vmatpush1.msra.mxu0 0.0
      %3345 = vmatprep.subr.mxu0 0.0
      %3346 = vmatpush1.msra.mxu0 0.0
      %3347 = vmatprep.subr.mxu0 0.0
      %3348 = vmatpush1.msra.mxu0 0.0
      %3349 = vmatprep.subr.mxu0 0.0
      %3350 = vmatpush1.msra.mxu0 0.0
      %3351 = vmatprep.subr.mxu0 0.0
      %3352 = vmatpush1.msra.mxu0 0.0
      %3353 = vmatprep.subr.mxu0 0.0
      %3354 = vmatpush1.msra.mxu0 0.0
      %3355 = vmatprep.subr.mxu0 0.0
      %3356 = vmatpush1.msra.mxu0 0.0
      %3357 = vmatprep.subr.mxu0 0.0
      %3358 = vmatpush1.msra.mxu0 0.0
      %3359 = vmatprep.subr.mxu0 0.0
      %3360 = vmatpush1.msra.mxu0 0.0
      %3361 = vmatprep.subr.mxu0 0.0
      %3362 = vmatpush1.msra.mxu0 0.0
      %3363 = vmatprep.subr.mxu0 0.0
      %3364 = vmatpush1.msra.mxu0 0.0
      %3365 = vmatprep.subr.mxu0 0.0
      %3366 = vmatpush1.msra.mxu0 0.0
      %3367 = vmatprep.subr.mxu0 0.0
      %3368 = vmatpush1.msra.mxu0 0.0
      %3369 = vmatprep.subr.mxu0 0.0
      %3370 = vmatpush1.msra.mxu0 0.0
      %3371 = vmatprep.subr.mxu0 0.0
      %3372 = vmatpush1.msra.mxu0 0.0
      %3373 = vmatprep.subr.mxu0 0.0
      %3374 = vmatpush1.msra.mxu0 0.0
      %3375 = vmatprep.subr.mxu0 0.0
      %3376 = vmatpush1.msra.mxu0 0.0
      %3377 = vmatprep.subr.mxu0 0.0
      %3378 = vmatpush1.msra.mxu0 0.0
      %3379 = vmatprep.subr.mxu0 0.0
      %3380 = vmatpush1.msra.mxu0 0.0
      %3381 = vmatprep.subr.mxu0 0.0
      %3382 = vmatpush1.msra.mxu0 0.0
      %3383 = vmatprep.subr.mxu0 0.0
      %3384 = vmatpush1.msra.mxu0 0.0
      %3385 = vmatprep.subr.mxu0 0.0
      %3386 = vmatpush1.msra.mxu0 0.0
      %3387 = vmatprep.subr.mxu0 0.0
      %3388 = vmatpush1.msra.mxu0 0.0
      %3389 = vmatprep.mubr.f32.mxu0 0.0
      %3390 = vmatmul.mubr.f32.gmra.mrb[0].mxu0 %v3230
      %v3391 = vpop.f32.mrb[0].mxu0
      %v3392 = vadd.f32 %v3226, %v3391
      %v3393 = vpop.f32.mrb[0].mxu0
      %3394 = vmatprep.mubr.f32.mxu0 0.0
      %3395 = vmatmul.mubr.f32.gmra.mrb[0].mxu0 %v3233
      %v3396 = vpop.f32.mrb[0].mxu0
      %v3397 = vadd.f32 %v3226, %v3396
      %v3398 = vpop.f32.mrb[0].mxu0
      %3399 = vmatprep.mubr.f32.mxu0 0.0
      %3400 = vmatmul.mubr.f32.gmra.mrb[0].mxu0 %v3236
      %v3401 = vpop.f32.mrb[0].mxu0
      %v3402 = vadd.f32 %v3226, %v3401
      %v3403 = vpop.f32.mrb[0].mxu0
      %3404 = vmatprep.mubr.f32.mxu0 0.0
      %3405 = vmatmul.mubr.f32.gmra.mrb[0].mxu0 %v3239
      %v3406 = vpop.f32.mrb[0].mxu0
      %v3407 = vadd.f32 %v3226, %v3406
      %v3408 = vpop.f32.mrb[0].mxu0
      %3409 = vmatprep.mubr.f32.mxu0 0.0
      %3410 = vmatmul.mubr.f32.gmra.mrb[0].mxu0 %v3242
      %v3411 = vpop.f32.mrb[0].mxu0
      %v3412 = vadd.f32 %v3226, %v3411
      %v3413 = vpop.f32.mrb[0].mxu0
      %3414 = vmatprep.mubr.f32.mxu0 0.0
      %3415 = vmatmul.mubr.f32.gmra.mrb[0].mxu0 %v3245
      %v3416 = vpop.f32.mrb[0].mxu0
      %v3417 = vadd.f32 %v3226, %v3416
      %v3418 = vpop.f32.mrb[0].mxu0
      %3419 = vmatprep.mubr.f32.mxu0 0.0
      %3420 = vmatmul.mubr.f32.gmra.mrb[0].mxu0 %v3248
      %v3421 = vpop.f32.mrb[0].mxu0
      %v3422 = vadd.f32 %v3226, %v3421
      %v3423 = vpop.f32.mrb[0].mxu0
      %3424 = vmatprep.mubr.f32.mxu0 0.0
      %3425 = vmatmul.mubr.f32.gmra.mrb[0].mxu0 %v3251
      %v3426 = vpop.f32.mrb[0].mxu0
      %v3427 = vadd.f32 %v3226, %v3426
      %v3428 = vpop.f32.mrb[0].mxu0
      %3429 = vmatprep.mubr.f32.mxu0 0.0
      %3430 = vmatmul.mubr.f32.gmra.mrb[0].mxu0 %v3254
      %v3431 = vpop.f32.mrb[0].mxu0
      %v3432 = vadd.f32 %v3226, %v3431
      %v3433 = vpop.f32.mrb[0].mxu0
      %3434 = vmatprep.mubr.f32.mxu0 0.0
      %3435 = vmatmul.mubr.f32.gmra.mrb[0].mxu0 %v3257
      %v3436 = vpop.f32.mrb[0].mxu0
      %v3437 = vadd.f32 %v3226, %v3436
      %v3438 = vpop.f32.mrb[0].mxu0
      %3439 = vmatprep.mubr.f32.mxu0 0.0
      %3440 = vmatmul.mubr.f32.gmra.mrb[0].mxu0 %v3260
      %v3441 = vpop.f32.mrb[0].mxu0
      %v3442 = vadd.f32 %v3226, %v3441
      %v3443 = vpop.f32.mrb[0].mxu0
      %3444 = vmatprep.mubr.f32.mxu0 0.0
      %3445 = vmatmul.mubr.f32.gmra.mrb[0].mxu0 %v3263
      %v3446 = vpop.f32.mrb[0].mxu0
      %v3447 = vadd.f32 %v3226, %v3446
      %v3448 = vpop.f32.mrb[0].mxu0
      %3449 = vmatprep.mubr.f32.mxu0 0.0
      %3450 = vmatmul.mubr.f32.gmra.mrb[0].mxu0 %v3266
      %v3451 = vpop.f32.mrb[0].mxu0
      %v3452 = vadd.f32 %v3226, %v3451
      %v3453 = vpop.f32.mrb[0].mxu0
      %3454 = vmatprep.mubr.f32.mxu0 0.0
      %3455 = vmatmul.mubr.f32.gmra.mrb[0].mxu0 %v3269
      %v3456 = vpop.f32.mrb[0].mxu0
      %v3457 = vadd.f32 %v3226, %v3456
      %v3458 = vpop.f32.mrb[0].mxu0
      %3459 = vmatprep.mubr.f32.mxu0 0.0
      %3460 = vmatmul.mubr.f32.gmra.mrb[0].mxu0 %v3272
      %v3461 = vpop.f32.mrb[0].mxu0
      %v3462 = vadd.f32 %v3226, %v3461
      %v3463 = vpop.f32.mrb[0].mxu0
      %3464 = vmatprep.mubr.f32.mxu0 0.0
      %3465 = vmatmul.mubr.f32.gmra.mrb[0].mxu0 %v3275
      %v3466 = vpop.f32.mrb[0].mxu0
      %v3467 = vadd.f32 %v3226, %v3466
      %v3468 = vpop.f32.mrb[0].mxu0
      %3469 = vmatprep.mubr.f32.mxu0 0.0
      %3470 = vmatmul.mubr.f32.gmra.mrb[0].mxu0 %v3278
      %v3471 = vpop.f32.mrb[0].mxu0
      %v3472 = vadd.f32 %v3226, %v3471
      %v3473 = vpop.f32.mrb[0].mxu0
      %3474 = vmatprep.mubr.f32.mxu0 0.0
      %3475 = vmatmul.mubr.f32.gmra.mrb[0].mxu0 %v3281
      %v3476 = vpop.f32.mrb[0].mxu0
      %v3477 = vadd.f32 %v3226, %v3476
      %v3478 = vpop.f32.mrb[0].mxu0
      %3479 = vmatprep.mubr.f32.mxu0 0.0
      %3480 = vmatmul.mubr.f32.gmra.mrb[0].mxu0 %v3284
      %v3481 = vpop.f32.mrb[0].mxu0
      %v3482 = vadd.f32 %v3226, %v3481
      %v3483 = vpop.f32.mrb[0].mxu0
      %3484 = vmatprep.mubr.f32.mxu0 0.0
      %3485 = vmatmul.mubr.f32.gmra.mrb[0].mxu0 %v3287
      %v3486 = vpop.f32.mrb[0].mxu0
      %v3487 = vadd.f32 %v3226, %v3486
      %v3488 = vpop.f32.mrb[0].mxu0
      %3489 = vmatprep.mubr.f32.mxu0 0.0
      %3490 = vmatmul.mubr.f32.gmra.mrb[0].mxu0 %v3290
      %v3491 = vpop.f32.mrb[0].mxu0
      %v3492 = vadd.f32 %v3226, %v3491
      %v3493 = vpop.f32.mrb[0].mxu0
      %3494 = vmatprep.mubr.f32.mxu0 0.0
      %3495 = vmatmul.mubr.f32.gmra.mrb[0].mxu0 %v3293
      %v3496 = vpop.f32.mrb[0].mxu0
      %v3497 = vadd.f32 %v3226, %v3496
      %v3498 = vpop.f32.mrb[0].mxu0
      %3499 = vmatprep.mubr.f32.mxu0 0.0
      %3500 = vmatmul.mubr.f32.gmra.mrb[0].mxu0 %v3296
      %v3501 = vpop.f32.mrb[0].mxu0
      %v3502 = vadd.f32 %v3226, %v3501
      %v3503 = vpop.f32.mrb[0].mxu0
      %3504 = vmatprep.mubr.f32.mxu0 0.0
      %3505 = vmatmul.mubr.f32.gmra.mrb[0].mxu0 %v3299
      %v3506 = vpop.f32.mrb[0].mxu0
      %v3507 = vadd.f32 %v3226, %v3506
      %v3508 = vpop.f32.mrb[0].mxu0
      %3509 = vmatprep.mubr.f32.mxu0 0.0
      %3510 = vmatmul.mubr.f32.gmra.mrb[0].mxu0 %v3302
      %v3511 = vpop.f32.mrb[0].mxu0
      %v3512 = vadd.f32 %v3226, %v3511
      %v3513 = vpop.f32.mrb[0].mxu0
      %3514 = vmatprep.mubr.f32.mxu0 0.0
      %3515 = vmatmul.mubr.f32.gmra.mrb[0].mxu0 %v3305
      %v3516 = vpop.f32.mrb[0].mxu0
      %v3517 = vadd.f32 %v3226, %v3516
      %v3518 = vpop.f32.mrb[0].mxu0
      %3519 = vmatprep.mubr.f32.mxu0 0.0
      %3520 = vmatmul.mubr.f32.gmra.mrb[0].mxu0 %v3308
      %v3521 = vpop.f32.mrb[0].mxu0
      %v3522 = vadd.f32 %v3226, %v3521
      %v3523 = vpop.f32.mrb[0].mxu0
      %3524 = vmatprep.mubr.f32.mxu0 0.0
      %3525 = vmatmul.mubr.f32.gmra.mrb[0].mxu0 %v3311
      %v3526 = vpop.f32.mrb[0].mxu0
      %v3527 = vadd.f32 %v3226, %v3526
      %v3528 = vpop.f32.mrb[0].mxu0
      %3529 = vmatprep.mubr.f32.mxu0 0.0
      %3530 = vmatmul.mubr.f32.gmra.mrb[0].mxu0 %v3314
      %v3531 = vpop.f32.mrb[0].mxu0
      %v3532 = vadd.f32 %v3226, %v3531
      %v3533 = vpop.f32.mrb[0].mxu0
      %3534 = vmatprep.mubr.f32.mxu0 0.0
      %3535 = vmatmul.mubr.f32.gmra.mrb[0].mxu0 %v3317
      %v3536 = vpop.f32.mrb[0].mxu0
      %v3537 = vadd.f32 %v3226, %v3536
      %v3538 = vpop.f32.mrb[0].mxu0
      %3539 = vmatprep.mubr.f32.mxu0 0.0
      %3540 = vmatmul.mubr.f32.gmra.mrb[0].mxu0 %v3320
      %v3541 = vpop.f32.mrb[0].mxu0
      %v3542 = vadd.f32 %v3226, %v3541
      %v3543 = vpop.f32.mrb[0].mxu0
      %3544 = vmatprep.mubr.f32.mxu0 0.0
      %3545 = vmatmul.mubr.f32.gmra.mrb[0].mxu0 %v3323
      %v3546 = vpop.f32.mrb[0].mxu0
      %v3547 = vadd.f32 %v3226, %v3546
      %v3548 = vpop.f32.mrb[0].mxu0
      %3549 = vdwg.mxu0
      %3550 = vst [vmem:[%s170] sm:$0xff] %v3392
      %3551 = vst [vmem:[%s170 + $0x8] sm:$0xff] %v3397
      %3552 = vst [vmem:[%s170 + $0x10] sm:$0xff] %v3402
      %3553 = vst [vmem:[%s170 + $0x18] sm:$0xff] %v3407
      %3554 = vst [vmem:[%s170 + $0x20] sm:$0xff] %v3412
      %3555 = vst [vmem:[%s170 + $0x28] sm:$0xff] %v3417
      %3556 = vst [vmem:[%s170 + $0x30] sm:$0xff] %v3422
      %3557 = vst [vmem:[%s170 + $0x38] sm:$0xff] %v3427
      %3558 = vst [vmem:[%s170 + $0x40] sm:$0xff] %v3432
      %3559 = vst [vmem:[%s170 + $0x48] sm:$0xff] %v3437
      %3560 = vst [vmem:[%s170 + $0x50] sm:$0xff] %v3442
      %3561 = vst [vmem:[%s170 + $0x58] sm:$0xff] %v3447
      %3562 = vst [vmem:[%s170 + $0x60] sm:$0xff] %v3452
      %3563 = vst [vmem:[%s170 + $0x68] sm:$0xff] %v3457
      %3564 = vst [vmem:[%s170 + $0x70] sm:$0xff] %v3462
      %3565 = vst [vmem:[%s170 + $0x78] sm:$0xff] %v3467
      %3566 = vst [vmem:[%s170 + $0x80] sm:$0xff] %v3472
      %3567 = vst [vmem:[%s170 + $0x88] sm:$0xff] %v3477
      %3568 = vst [vmem:[%s170 + $0x90] sm:$0xff] %v3482
      %3569 = vst [vmem:[%s170 + $0x98] sm:$0xff] %v3487
      %3570 = vst [vmem:[%s170 + $0xa0] sm:$0xff] %v3492
      %3571 = vst [vmem:[%s170 + $0xa8] sm:$0xff] %v3497
      %3572 = vst [vmem:[%s170 + $0xb0] sm:$0xff] %v3502
      %3573 = vst [vmem:[%s170 + $0xb8] sm:$0xff] %v3507
      %3574 = vst [vmem:[%s170 + $0xc0] sm:$0xff] %v3512
      %3575 = vst [vmem:[%s170 + $0xc8] sm:$0xff] %v3517
      %3576 = vst [vmem:[%s170 + $0xd0] sm:$0xff] %v3522
      %3577 = vst [vmem:[%s170 + $0xd8] sm:$0xff] %v3527
      %3578 = vst [vmem:[%s170 + $0xe0] sm:$0xff] %v3532
      %3579 = vst [vmem:[%s170 + $0xe8] sm:$0xff] %v3537
      %3580 = vst [vmem:[%s170 + $0xf0] sm:$0xff] %v3542
      %3581 = vst [vmem:[%s170 + $0xf8] sm:$0xff] %v3547
      %p3582 = scmp.lt.s32.totalorder %s14, 1
      %s3583 = scalar_select %p3582, %s14, 1
      %s3584 = smul.addr %s3583, 32
      %s3585 = smul.addr %s3584, 8
      %s3586 = scalar_lea.vmem %s3, %s3585
      // Predicated region
      $region33: #{posnegconv_forward.1} parent=31 // pred_check
        %p3587 = pneg %p100
      $region34: #{posnegconv_forward.1} parent=31 // pred_check_branch
        %3589 = sbr.rel (%p3587) target = $region36
      $region35: #{posnegconv_forward.1} parent=31 // pred_region
        _
      $region36: #{posnegconv_forward.1} parent=31 // pred_fallthru
        _
    $region32: #{posnegconv_forward.1} parent=5 // pred_fallthru
      _
    %p3590 = scmp.le.s32.totalorder 2, %s9
    // Predicated region
    $region37: #{posnegconv_forward.1} parent=5 // pred_check
      %p3591 = pneg %p3590
    $region38: #{posnegconv_forward.1} parent=5 // pred_check_branch
      %3593 = sbr.rel (%p3591) target = $region40
    $region39: #{posnegconv_forward.1} parent=5 // pred_region
      %s3594 = ssub.s32 %s9, 2
      // Predicated region
      $region41: #{posnegconv_forward.1} parent=39 // pred_check
        %p3595 = pneg %p106
      $region42: #{posnegconv_forward.1} parent=39 // pred_check_branch
        %3597 = sbr.rel (%p3595) target = $region44
      $region43: #{posnegconv_forward.1} parent=39 // pred_region
        %p3598 = scmp.lt.s32.totalorder %s15, 1
        %s3599 = scalar_select %p3598, %s15, 1
        %s3600 = smul.addr %s3599, 32
        %s3601 = smul.addr %s3600, 8
        %s3602 = scalar_lea.vmem %s3, %s3601
      $region44: #{posnegconv_forward.1} parent=39 // pred_fallthru
        _
    $region40: #{posnegconv_forward.1} parent=5 // pred_fallthru
      _
  $region6: #{posnegconv_forward.1} parent=0 // loop_footer
    %s13 = sadd.s32 1, %s9
  $region7: #{posnegconv_forward.1} parent=0 // loop_footer_branch
    %8 = sbr.rel target = $region3
  $region8: #{posnegconv_forward.1} parent=0 // loop_exit
    _

</llo_original>
